<compile_context>
chip_gen: v7x
topology: tpu7x:2x2x1
jax: 0.10.0
libtpu: 0.0.40
codegen_flags: <defaults>
</compile_context>

<pallas_src>
import jax
import jax.numpy as jnp
from jax import lax
from jax.experimental import pallas as pl
from jax.experimental.pallas import tpu as pltpu


# ---------------------------------------------------------------------------
# In-kernel helpers
# ---------------------------------------------------------------------------
def _bn_relu(x):
    """BatchNorm1d in training mode with identity affine (fresh module), + ReLU.

    Kept entirely in f32 (v5e VPU/EUP have no bf16 path)."""
    mean = jnp.mean(x, axis=0, keepdims=True)
    var = jnp.mean(jnp.square(x - mean), axis=0, keepdims=True)  # biased (PyTorch)
    return jnp.maximum((x - mean) * lax.rsqrt(var + 1e-5), 0.0)


# ---------------------------------------------------------------------------
# Single fused kernel: conv1 -> BN+ReLU -> conv2 -> BN+ReLU -> linear
# ---------------------------------------------------------------------------
def _rgcn_fused_kernel(a_ref, x_ref, w1_ref, b1_ref, w2_ref, b2_ref,
                       lw_ref, lb_ref, o_ref, m1_scr, m2_scr):
    N = x_ref.shape[0]
    R1 = a_ref.shape[0] // N          # num_relations + 1 (root identity block)
    a = a_ref[...]                    # (R1*N, N) bf16, row = r*N + dst

    def rgcn_layer(h, w2d_ref, b_ref, m_scr):
        fin = h.shape[1]
        # (1) aggregate-first: ONE MXU contraction over sources (K = N) that
        #     covers all relations AND the root/self term (identity block).
        m = jnp.dot(a, h.astype(jnp.bfloat16),
                    preferred_element_type=jnp.float32)        # (R1*N, fin) f32
        # (2) explicit relayout (r*N+dst, f) -> (dst, r*fin+f): static,
        #     sublane-aligned slices of the matmul output stored as lane slabs
        #     into a bf16 VMEM scratch (guaranteed-lowerable data movement).
        for r in range(R1):
            m_scr[:, r * fin:(r + 1) * fin] = (
                m[r * N:(r + 1) * N, :].astype(jnp.bfloat16))
        # (3) ONE MXU contraction over (relation, feature): K = R1*fin.
        #     Root weight rides along as relation R1-1; bias is a single vadd.
        return (jnp.dot(m_scr[...], w2d_ref[...].astype(jnp.bfloat16),
                        preferred_element_type=jnp.float32) + b_ref[...])

    h = _bn_relu(rgcn_layer(x_ref[...], w1_ref, b1_ref, m1_scr))
    h = _bn_relu(rgcn_layer(h, w2_ref, b2_ref, m2_scr))
    o_ref[...] = (jnp.dot(h.astype(jnp.bfloat16), lw_ref[...].astype(jnp.bfloat16),
                          preferred_element_type=jnp.float32) + lb_ref[...])


def rgcn_forward(x, a_ext, w2d1, b1, w2d2, b2, lin_w, lin_b):
    N, in_ch = x.shape
    out_ch = lin_w.shape[1]
    k1, f1 = w2d1.shape
    k2, f2 = w2d2.shape

    args = (a_ext, x, w2d1, b1.reshape(1, -1), w2d2, b2.reshape(1, -1),
            lin_w, lin_b.reshape(1, -1))

    flops = 2 * (a_ext.shape[0] * N * in_ch + N * k1 * f1 +
                 a_ext.shape[0] * N * f1 + N * k2 * f2 +
                 N * lin_w.shape[0] * out_ch)
    bytes_accessed = sum(int(v.size) * v.dtype.itemsize for v in args) + N * out_ch * 4

    # Everything fits in VMEM at these shapes: full-array blocks, no grid.
    return pl.pallas_call(
        _rgcn_fused_kernel,
        out_shape=jax.ShapeDtypeStruct((N, out_ch), jnp.float32),
        in_specs=[pl.BlockSpec(memory_space=pltpu.MemorySpace.VMEM)] * len(args),
        out_specs=pl.BlockSpec(memory_space=pltpu.MemorySpace.VMEM),
        scratch_shapes=[pltpu.VMEM((N, k1), jnp.bfloat16),
                        pltpu.VMEM((N, k2), jnp.bfloat16)],
        cost_estimate=pl.CostEstimate(flops=flops, transcendentals=f1 + f2,
                                      bytes_accessed=bytes_accessed),
    )(*args)


# ---------------------------------------------------------------------------
# Host-side glue (format conversion only; no kernel math moved to host)
# ---------------------------------------------------------------------------
def build_norm_adj(edge_index, edge_type, num_nodes, num_relations):
    """adj_norm[r, dst, src] = 1/deg_r(dst) for edges (src -r-> dst).
    Matches PyG RGCNConv's mean aggregation over incoming edges per relation."""
    src, dst = edge_index[0], edge_index[1]
    adj = jnp.zeros((num_relations, num_nodes, num_nodes), jnp.float32)
    adj = adj.at[edge_type, dst, src].add(1.0)
    deg = adj.sum(axis=2, keepdims=True)
    return adj * jnp.where(deg > 0, 1.0 / jnp.maximum(deg, 1.0), 0.0)


def flatten_adj_with_root(adj_norm):
    """(R, N, N) -> ((R+1)*N, N) bf16, with an identity block appended as the
    extra 'relation' that carries the root/self weight."""
    R, N, _ = adj_norm.shape
    adj_ext = jnp.concatenate(
        [adj_norm, jnp.eye(N, dtype=adj_norm.dtype)[None]], axis=0)
    return adj_ext.reshape((R + 1) * N, N).astype(jnp.bfloat16)


def flatten_rel_weights(w, root):
    """(R, fin, fout) + (fin, fout) -> ((R+1)*fin, fout), row = r*fin + f."""
    return jnp.concatenate([w, root[None]], axis=0).reshape(-1, w.shape[-1])


# ---------------------------------------------------------------------------
# Pure-JAX f32 reference (same semantics, independent formulation)
# ---------------------------------------------------------------------------
def rgcn_reference(x, adj_norm, params):
    def layer(h, w, root, b):
        agg = jnp.einsum("rds,sf->rdf", adj_norm, h)
        return jnp.einsum("rdf,rfo->do", agg, w) + h @ root + b

    def bn_relu(v):
        m = v.mean(0, keepdims=True)
        var = ((v - m) ** 2).mean(0, keepdims=True)
        return jnp.maximum((v - m) / jnp.sqrt(var + 1e-5), 0.0)

    h = bn_relu(layer(x, params["w1"], params["root1"], params["b1"]))
    h = bn_relu(layer(h, params["w2"], params["root2"], params["b2"]))
    return h @ params["lin_w"] + params["lin_b"]


if __name__ == "__main__":
    N = 32                 # number of nodes
    E = 64                 # number of edges
    IN_CH = 4
    HIDDEN = 8             # conv_in outputs 2*HIDDEN = 16
    OUT_CH = 4
    R = 16                 # num_relations

    key = jax.random.PRNGKey(0)
    keys = jax.random.split(key, 12)

    # deterministic synthetic parameters (not a checkpoint)
    params = {
        "w1": 0.1 * jax.random.normal(keys[0], (R, IN_CH, 2 * HIDDEN), jnp.float32),
        "root1": 0.1 * jax.random.normal(keys[1], (IN_CH, 2 * HIDDEN), jnp.float32),
        "b1": 0.1 * jax.random.normal(keys[2], (2 * HIDDEN,), jnp.float32),
        "w2": 0.1 * jax.random.normal(keys[3], (R, 2 * HIDDEN, HIDDEN), jnp.float32),
        "root2": 0.1 * jax.random.normal(keys[4], (2 * HIDDEN, HIDDEN), jnp.float32),
        "b2": 0.1 * jax.random.normal(keys[5], (HIDDEN,), jnp.float32),
        "lin_w": 0.1 * jax.random.normal(keys[6], (HIDDEN, OUT_CH), jnp.float32),
        "lin_b": 0.1 * jax.random.normal(keys[7], (OUT_CH,), jnp.float32),
    }

    # deterministic inputs
    x = jax.random.normal(keys[8], (N, IN_CH), jnp.float32)
    edge_index = jax.random.randint(keys[9], (2, E), 0, N, jnp.int32)
    edge_type = jax.random.randint(keys[10], (E,), 0, R, jnp.int32)

    adj_norm = build_norm_adj(edge_index, edge_type, N, R)
    a_ext = flatten_adj_with_root(adj_norm)                     # ((R+1)*N, N) bf16
    w2d1 = flatten_rel_weights(params["w1"], params["root1"])   # (68, 16)
    w2d2 = flatten_rel_weights(params["w2"], params["root2"])   # (272, 8)

    out = rgcn_forward(x, a_ext, w2d1, params["b1"], w2d2, params["b2"],
                       params["lin_w"], params["lin_b"])
    jax.block_until_ready(out)

    assert out.shape == (N, OUT_CH)

    # loose tolerance: kernel uses bf16 MXU operands with f32 accumulation
    ref = rgcn_reference(x, adj_norm, params)
    max_err = float(jnp.max(jnp.abs(out - ref)))
    assert max_err < 0.15, f"max_err={max_err}"

    print("KERNEL_OK")
</pallas_src>

<mosaic_0001>
module attributes {stable_mosaic.version = 11 : i64} {
  func.func @_rgcn_fused_kernel(%arg0: memref<544x32xbf16, #tpu.memory_space<vmem>>, %arg1: memref<32x4xf32, #tpu.memory_space<vmem>>, %arg2: memref<68x16xf32, #tpu.memory_space<vmem>>, %arg3: memref<1x16xf32, #tpu.memory_space<vmem>>, %arg4: memref<272x8xf32, #tpu.memory_space<vmem>>, %arg5: memref<1x8xf32, #tpu.memory_space<vmem>>, %arg6: memref<8x4xf32, #tpu.memory_space<vmem>>, %arg7: memref<1x4xf32, #tpu.memory_space<vmem>>, %arg8: memref<32x4xf32, #tpu.memory_space<vmem>>, %arg9: memref<32x68xbf16, #tpu.memory_space<vmem>>, %arg10: memref<32x272xbf16, #tpu.memory_space<vmem>>) attributes {dimension_semantics = [], scalar_prefetch = 0 : i64, scratch_operands = 2 : i64, tpu.core_type = #tpu.core_type<tc>} {
    %c0 = arith.constant 0 : index
    %c0_0 = arith.constant 0 : index
    %0 = vector.load %arg0[%c0, %c0_0] : memref<544x32xbf16, #tpu.memory_space<vmem>>, vector<544x32xbf16>
    %c0_1 = arith.constant 0 : index
    %c0_2 = arith.constant 0 : index
    %1 = vector.load %arg1[%c0_1, %c0_2] : memref<32x4xf32, #tpu.memory_space<vmem>>, vector<32x4xf32>
    %2 = arith.truncf %1 : vector<32x4xf32> to vector<32x4xbf16>
    %cst = arith.constant dense<0.000000e+00> : vector<544x4xf32>
    %3 = tpu.matmul %0, %2, %cst {dimension_numbers = #tpu.dot_dimension_numbers<[1], [0], [0], [1], [0, 0, 1, 1], [], []>} : vector<544x32xbf16>, vector<32x4xbf16>, vector<544x4xf32> -> vector<544x4xf32>
    %4 = vector.extract_strided_slice %3 {offsets = [0, 0], sizes = [32, 4], strides = [1, 1]} : vector<544x4xf32> to vector<32x4xf32>
    %5 = arith.truncf %4 : vector<32x4xf32> to vector<32x4xbf16>
    %c0_3 = arith.constant 0 : index
    %c0_4 = arith.constant 0 : index
    %6 = vector.load %arg9[%c0_3, %c0_4] : memref<32x68xbf16, #tpu.memory_space<vmem>>, vector<32x4xbf16>
    tpu.vector_store %arg9[%c0_3, %c0_4], %5 {strides = array<i32>} : memref<32x68xbf16, #tpu.memory_space<vmem>>, vector<32x4xbf16>,
    %7 = vector.extract_strided_slice %3 {offsets = [32, 0], sizes = [32, 4], strides = [1, 1]} : vector<544x4xf32> to vector<32x4xf32>
    %8 = arith.truncf %7 : vector<32x4xf32> to vector<32x4xbf16>
    %c0_5 = arith.constant 0 : index
    %c4 = arith.constant 4 : index
    %9 = vector.load %arg9[%c0_5, %c4] : memref<32x68xbf16, #tpu.memory_space<vmem>>, vector<32x4xbf16>
    tpu.vector_store %arg9[%c0_5, %c4], %8 {strides = array<i32>} : memref<32x68xbf16, #tpu.memory_space<vmem>>, vector<32x4xbf16>,
    %10 = vector.extract_strided_slice %3 {offsets = [64, 0], sizes = [32, 4], strides = [1, 1]} : vector<544x4xf32> to vector<32x4xf32>
    %11 = arith.truncf %10 : vector<32x4xf32> to vector<32x4xbf16>
    %c0_6 = arith.constant 0 : index
    %c8 = arith.constant 8 : index
    %12 = vector.load %arg9[%c0_6, %c8] : memref<32x68xbf16, #tpu.memory_space<vmem>>, vector<32x4xbf16>
    tpu.vector_store %arg9[%c0_6, %c8], %11 {strides = array<i32>} : memref<32x68xbf16, #tpu.memory_space<vmem>>, vector<32x4xbf16>,
    %13 = vector.extract_strided_slice %3 {offsets = [96, 0], sizes = [32, 4], strides = [1, 1]} : vector<544x4xf32> to vector<32x4xf32>
    %14 = arith.truncf %13 : vector<32x4xf32> to vector<32x4xbf16>
    %c0_7 = arith.constant 0 : index
    %c12 = arith.constant 12 : index
    %15 = vector.load %arg9[%c0_7, %c12] : memref<32x68xbf16, #tpu.memory_space<vmem>>, vector<32x4xbf16>
    tpu.vector_store %arg9[%c0_7, %c12], %14 {strides = array<i32>} : memref<32x68xbf16, #tpu.memory_space<vmem>>, vector<32x4xbf16>,
    %16 = vector.extract_strided_slice %3 {offsets = [128, 0], sizes = [32, 4], strides = [1, 1]} : vector<544x4xf32> to vector<32x4xf32>
    %17 = arith.truncf %16 : vector<32x4xf32> to vector<32x4xbf16>
    %c0_8 = arith.constant 0 : index
    %c16 = arith.constant 16 : index
    %18 = vector.load %arg9[%c0_8, %c16] : memref<32x68xbf16, #tpu.memory_space<vmem>>, vector<32x4xbf16>
    tpu.vector_store %arg9[%c0_8, %c16], %17 {strides = array<i32>} : memref<32x68xbf16, #tpu.memory_space<vmem>>, vector<32x4xbf16>,
    %19 = vector.extract_strided_slice %3 {offsets = [160, 0], sizes = [32, 4], strides = [1, 1]} : vector<544x4xf32> to vector<32x4xf32>
    %20 = arith.truncf %19 : vector<32x4xf32> to vector<32x4xbf16>
    %c0_9 = arith.constant 0 : index
    %c20 = arith.constant 20 : index
    %21 = vector.load %arg9[%c0_9, %c20] : memref<32x68xbf16, #tpu.memory_space<vmem>>, vector<32x4xbf16>
    tpu.vector_store %arg9[%c0_9, %c20], %20 {strides = array<i32>} : memref<32x68xbf16, #tpu.memory_space<vmem>>, vector<32x4xbf16>,
    %22 = vector.extract_strided_slice %3 {offsets = [192, 0], sizes = [32, 4], strides = [1, 1]} : vector<544x4xf32> to vector<32x4xf32>
    %23 = arith.truncf %22 : vector<32x4xf32> to vector<32x4xbf16>
    %c0_10 = arith.constant 0 : index
    %c24 = arith.constant 24 : index
    %24 = vector.load %arg9[%c0_10, %c24] : memref<32x68xbf16, #tpu.memory_space<vmem>>, vector<32x4xbf16>
    tpu.vector_store %arg9[%c0_10, %c24], %23 {strides = array<i32>} : memref<32x68xbf16, #tpu.memory_space<vmem>>, vector<32x4xbf16>,
    %25 = vector.extract_strided_slice %3 {offsets = [224, 0], sizes = [32, 4], strides = [1, 1]} : vector<544x4xf32> to vector<32x4xf32>
    %26 = arith.truncf %25 : vector<32x4xf32> to vector<32x4xbf16>
    %c0_11 = arith.constant 0 : index
    %c28 = arith.constant 28 : index
    %27 = vector.load %arg9[%c0_11, %c28] : memref<32x68xbf16, #tpu.memory_space<vmem>>, vector<32x4xbf16>
    tpu.vector_store %arg9[%c0_11, %c28], %26 {strides = array<i32>} : memref<32x68xbf16, #tpu.memory_space<vmem>>, vector<32x4xbf16>,
    %28 = vector.extract_strided_slice %3 {offsets = [256, 0], sizes = [32, 4], strides = [1, 1]} : vector<544x4xf32> to vector<32x4xf32>
    %29 = arith.truncf %28 : vector<32x4xf32> to vector<32x4xbf16>
    %c0_12 = arith.constant 0 : index
    %c32 = arith.constant 32 : index
    %30 = vector.load %arg9[%c0_12, %c32] : memref<32x68xbf16, #tpu.memory_space<vmem>>, vector<32x4xbf16>
    tpu.vector_store %arg9[%c0_12, %c32], %29 {strides = array<i32>} : memref<32x68xbf16, #tpu.memory_space<vmem>>, vector<32x4xbf16>,
    %31 = vector.extract_strided_slice %3 {offsets = [288, 0], sizes = [32, 4], strides = [1, 1]} : vector<544x4xf32> to vector<32x4xf32>
    %32 = arith.truncf %31 : vector<32x4xf32> to vector<32x4xbf16>
    %c0_13 = arith.constant 0 : index
    %c36 = arith.constant 36 : index
    %33 = vector.load %arg9[%c0_13, %c36] : memref<32x68xbf16, #tpu.memory_space<vmem>>, vector<32x4xbf16>
    tpu.vector_store %arg9[%c0_13, %c36], %32 {strides = array<i32>} : memref<32x68xbf16, #tpu.memory_space<vmem>>, vector<32x4xbf16>,
    %34 = vector.extract_strided_slice %3 {offsets = [320, 0], sizes = [32, 4], strides = [1, 1]} : vector<544x4xf32> to vector<32x4xf32>
    %35 = arith.truncf %34 : vector<32x4xf32> to vector<32x4xbf16>
    %c0_14 = arith.constant 0 : index
    %c40 = arith.constant 40 : index
    %36 = vector.load %arg9[%c0_14, %c40] : memref<32x68xbf16, #tpu.memory_space<vmem>>, vector<32x4xbf16>
    tpu.vector_store %arg9[%c0_14, %c40], %35 {strides = array<i32>} : memref<32x68xbf16, #tpu.memory_space<vmem>>, vector<32x4xbf16>,
    %37 = vector.extract_strided_slice %3 {offsets = [352, 0], sizes = [32, 4], strides = [1, 1]} : vector<544x4xf32> to vector<32x4xf32>
    %38 = arith.truncf %37 : vector<32x4xf32> to vector<32x4xbf16>
    %c0_15 = arith.constant 0 : index
    %c44 = arith.constant 44 : index
    %39 = vector.load %arg9[%c0_15, %c44] : memref<32x68xbf16, #tpu.memory_space<vmem>>, vector<32x4xbf16>
    tpu.vector_store %arg9[%c0_15, %c44], %38 {strides = array<i32>} : memref<32x68xbf16, #tpu.memory_space<vmem>>, vector<32x4xbf16>,
    %40 = vector.extract_strided_slice %3 {offsets = [384, 0], sizes = [32, 4], strides = [1, 1]} : vector<544x4xf32> to vector<32x4xf32>
    %41 = arith.truncf %40 : vector<32x4xf32> to vector<32x4xbf16>
    %c0_16 = arith.constant 0 : index
    %c48 = arith.constant 48 : index
    %42 = vector.load %arg9[%c0_16, %c48] : memref<32x68xbf16, #tpu.memory_space<vmem>>, vector<32x4xbf16>
    tpu.vector_store %arg9[%c0_16, %c48], %41 {strides = array<i32>} : memref<32x68xbf16, #tpu.memory_space<vmem>>, vector<32x4xbf16>,
    %43 = vector.extract_strided_slice %3 {offsets = [416, 0], sizes = [32, 4], strides = [1, 1]} : vector<544x4xf32> to vector<32x4xf32>
    %44 = arith.truncf %43 : vector<32x4xf32> to vector<32x4xbf16>
    %c0_17 = arith.constant 0 : index
    %c52 = arith.constant 52 : index
    %45 = vector.load %arg9[%c0_17, %c52] : memref<32x68xbf16, #tpu.memory_space<vmem>>, vector<32x4xbf16>
    tpu.vector_store %arg9[%c0_17, %c52], %44 {strides = array<i32>} : memref<32x68xbf16, #tpu.memory_space<vmem>>, vector<32x4xbf16>,
    %46 = vector.extract_strided_slice %3 {offsets = [448, 0], sizes = [32, 4], strides = [1, 1]} : vector<544x4xf32> to vector<32x4xf32>
    %47 = arith.truncf %46 : vector<32x4xf32> to vector<32x4xbf16>
    %c0_18 = arith.constant 0 : index
    %c56 = arith.constant 56 : index
    %48 = vector.load %arg9[%c0_18, %c56] : memref<32x68xbf16, #tpu.memory_space<vmem>>, vector<32x4xbf16>
    tpu.vector_store %arg9[%c0_18, %c56], %47 {strides = array<i32>} : memref<32x68xbf16, #tpu.memory_space<vmem>>, vector<32x4xbf16>,
    %49 = vector.extract_strided_slice %3 {offsets = [480, 0], sizes = [32, 4], strides = [1, 1]} : vector<544x4xf32> to vector<32x4xf32>
    %50 = arith.truncf %49 : vector<32x4xf32> to vector<32x4xbf16>
    %c0_19 = arith.constant 0 : index
    %c60 = arith.constant 60 : index
    %51 = vector.load %arg9[%c0_19, %c60] : memref<32x68xbf16, #tpu.memory_space<vmem>>, vector<32x4xbf16>
    tpu.vector_store %arg9[%c0_19, %c60], %50 {strides = array<i32>} : memref<32x68xbf16, #tpu.memory_space<vmem>>, vector<32x4xbf16>,
    %52 = vector.extract_strided_slice %3 {offsets = [512, 0], sizes = [32, 4], strides = [1, 1]} : vector<544x4xf32> to vector<32x4xf32>
    %53 = arith.truncf %52 : vector<32x4xf32> to vector<32x4xbf16>
    %c0_20 = arith.constant 0 : index
    %c64 = arith.constant 64 : index
    %54 = vector.load %arg9[%c0_20, %c64] : memref<32x68xbf16, #tpu.memory_space<vmem>>, vector<32x4xbf16>
    tpu.vector_store %arg9[%c0_20, %c64], %53 {strides = array<i32>} : memref<32x68xbf16, #tpu.memory_space<vmem>>, vector<32x4xbf16>,
    %c0_21 = arith.constant 0 : index
    %c0_22 = arith.constant 0 : index
    %55 = vector.load %arg9[%c0_21, %c0_22] : memref<32x68xbf16, #tpu.memory_space<vmem>>, vector<32x68xbf16>
    %c0_23 = arith.constant 0 : index
    %c0_24 = arith.constant 0 : index
    %56 = vector.load %arg2[%c0_23, %c0_24] : memref<68x16xf32, #tpu.memory_space<vmem>>, vector<68x16xf32>
    %57 = arith.truncf %56 : vector<68x16xf32> to vector<68x16xbf16>
    %cst_25 = arith.constant dense<0.000000e+00> : vector<32x16xf32>
    %58 = tpu.matmul %55, %57, %cst_25 {dimension_numbers = #tpu.dot_dimension_numbers<[1], [0], [0], [1], [0, 0, 1, 1], [], []>} : vector<32x68xbf16>, vector<68x16xbf16>, vector<32x16xf32> -> vector<32x16xf32>
    %c0_26 = arith.constant 0 : index
    %c0_27 = arith.constant 0 : index
    %59 = vector.load %arg3[%c0_26, %c0_27] : memref<1x16xf32, #tpu.memory_space<vmem>>, vector<1x16xf32>
    %60 = vector.broadcast %59 : vector<1x16xf32> to vector<32x16xf32>
    %61 = arith.addf %58, %60 : vector<32x16xf32>
    %cst_28 = arith.constant dense<0.000000e+00> : vector<16xf32>
    %62 = vector.multi_reduction <add>, %61, %cst_28 [0] : vector<32x16xf32> to vector<16xf32>
    %63 = vector.shape_cast %62 : vector<16xf32> to vector<1x16xf32>
    %cst_29 = arith.constant 3.200000e+01 : f32
    %64 = vector.broadcast %cst_29 : f32 to vector<1x16xf32>
    %65 = arith.divf %63, %64 : vector<1x16xf32>
    %66 = vector.broadcast %65 : vector<1x16xf32> to vector<32x16xf32>
    %67 = arith.subf %61, %66 : vector<32x16xf32>
    %68 = arith.mulf %67, %67 : vector<32x16xf32>
    %cst_30 = arith.constant dense<0.000000e+00> : vector<16xf32>
    %69 = vector.multi_reduction <add>, %68, %cst_30 [0] : vector<32x16xf32> to vector<16xf32>
    %70 = vector.shape_cast %69 : vector<16xf32> to vector<1x16xf32>
    %cst_31 = arith.constant 3.200000e+01 : f32
    %71 = vector.broadcast %cst_31 : f32 to vector<1x16xf32>
    %72 = arith.divf %70, %71 : vector<1x16xf32>
    %73 = vector.broadcast %65 : vector<1x16xf32> to vector<32x16xf32>
    %74 = arith.subf %61, %73 : vector<32x16xf32>
    %cst_32 = arith.constant 9.99999974E-6 : f32
    %75 = vector.broadcast %cst_32 : f32 to vector<1x16xf32>
    %76 = arith.addf %72, %75 : vector<1x16xf32>
    %77 = math.rsqrt %76 : vector<1x16xf32>
    %78 = vector.broadcast %77 : vector<1x16xf32> to vector<32x16xf32>
    %79 = arith.mulf %74, %78 : vector<32x16xf32>
    %cst_33 = arith.constant 0.000000e+00 : f32
    %80 = vector.broadcast %cst_33 : f32 to vector<32x16xf32>
    %81 = arith.maximumf %79, %80 : vector<32x16xf32>
    %82 = arith.truncf %81 : vector<32x16xf32> to vector<32x16xbf16>
    %cst_34 = arith.constant dense<0.000000e+00> : vector<544x16xf32>
    %83 = tpu.matmul %0, %82, %cst_34 {dimension_numbers = #tpu.dot_dimension_numbers<[1], [0], [0], [1], [0, 0, 1, 1], [], []>} : vector<544x32xbf16>, vector<32x16xbf16>, vector<544x16xf32> -> vector<544x16xf32>
    %84 = vector.extract_strided_slice %83 {offsets = [0, 0], sizes = [32, 16], strides = [1, 1]} : vector<544x16xf32> to vector<32x16xf32>
    %85 = arith.truncf %84 : vector<32x16xf32> to vector<32x16xbf16>
    %c0_35 = arith.constant 0 : index
    %c0_36 = arith.constant 0 : index
    %86 = vector.load %arg10[%c0_35, %c0_36] : memref<32x272xbf16, #tpu.memory_space<vmem>>, vector<32x16xbf16>
    tpu.vector_store %arg10[%c0_35, %c0_36], %85 {strides = array<i32>} : memref<32x272xbf16, #tpu.memory_space<vmem>>, vector<32x16xbf16>,
    %87 = vector.extract_strided_slice %83 {offsets = [32, 0], sizes = [32, 16], strides = [1, 1]} : vector<544x16xf32> to vector<32x16xf32>
    %88 = arith.truncf %87 : vector<32x16xf32> to vector<32x16xbf16>
    %c0_37 = arith.constant 0 : index
    %c16_38 = arith.constant 16 : index
    %89 = vector.load %arg10[%c0_37, %c16_38] : memref<32x272xbf16, #tpu.memory_space<vmem>>, vector<32x16xbf16>
    tpu.vector_store %arg10[%c0_37, %c16_38], %88 {strides = array<i32>} : memref<32x272xbf16, #tpu.memory_space<vmem>>, vector<32x16xbf16>,
    %90 = vector.extract_strided_slice %83 {offsets = [64, 0], sizes = [32, 16], strides = [1, 1]} : vector<544x16xf32> to vector<32x16xf32>
    %91 = arith.truncf %90 : vector<32x16xf32> to vector<32x16xbf16>
    %c0_39 = arith.constant 0 : index
    %c32_40 = arith.constant 32 : index
    %92 = vector.load %arg10[%c0_39, %c32_40] : memref<32x272xbf16, #tpu.memory_space<vmem>>, vector<32x16xbf16>
    tpu.vector_store %arg10[%c0_39, %c32_40], %91 {strides = array<i32>} : memref<32x272xbf16, #tpu.memory_space<vmem>>, vector<32x16xbf16>,
    %93 = vector.extract_strided_slice %83 {offsets = [96, 0], sizes = [32, 16], strides = [1, 1]} : vector<544x16xf32> to vector<32x16xf32>
    %94 = arith.truncf %93 : vector<32x16xf32> to vector<32x16xbf16>
    %c0_41 = arith.constant 0 : index
    %c48_42 = arith.constant 48 : index
    %95 = vector.load %arg10[%c0_41, %c48_42] : memref<32x272xbf16, #tpu.memory_space<vmem>>, vector<32x16xbf16>
    tpu.vector_store %arg10[%c0_41, %c48_42], %94 {strides = array<i32>} : memref<32x272xbf16, #tpu.memory_space<vmem>>, vector<32x16xbf16>,
    %96 = vector.extract_strided_slice %83 {offsets = [128, 0], sizes = [32, 16], strides = [1, 1]} : vector<544x16xf32> to vector<32x16xf32>
    %97 = arith.truncf %96 : vector<32x16xf32> to vector<32x16xbf16>
    %c0_43 = arith.constant 0 : index
    %c64_44 = arith.constant 64 : index
    %98 = vector.load %arg10[%c0_43, %c64_44] : memref<32x272xbf16, #tpu.memory_space<vmem>>, vector<32x16xbf16>
    tpu.vector_store %arg10[%c0_43, %c64_44], %97 {strides = array<i32>} : memref<32x272xbf16, #tpu.memory_space<vmem>>, vector<32x16xbf16>,
    %99 = vector.extract_strided_slice %83 {offsets = [160, 0], sizes = [32, 16], strides = [1, 1]} : vector<544x16xf32> to vector<32x16xf32>
    %100 = arith.truncf %99 : vector<32x16xf32> to vector<32x16xbf16>
    %c0_45 = arith.constant 0 : index
    %c80 = arith.constant 80 : index
    %101 = vector.load %arg10[%c0_45, %c80] : memref<32x272xbf16, #tpu.memory_space<vmem>>, vector<32x16xbf16>
    tpu.vector_store %arg10[%c0_45, %c80], %100 {strides = array<i32>} : memref<32x272xbf16, #tpu.memory_space<vmem>>, vector<32x16xbf16>,
    %102 = vector.extract_strided_slice %83 {offsets = [192, 0], sizes = [32, 16], strides = [1, 1]} : vector<544x16xf32> to vector<32x16xf32>
    %103 = arith.truncf %102 : vector<32x16xf32> to vector<32x16xbf16>
    %c0_46 = arith.constant 0 : index
    %c96 = arith.constant 96 : index
    %104 = vector.load %arg10[%c0_46, %c96] : memref<32x272xbf16, #tpu.memory_space<vmem>>, vector<32x16xbf16>
    tpu.vector_store %arg10[%c0_46, %c96], %103 {strides = array<i32>} : memref<32x272xbf16, #tpu.memory_space<vmem>>, vector<32x16xbf16>,
    %105 = vector.extract_strided_slice %83 {offsets = [224, 0], sizes = [32, 16], strides = [1, 1]} : vector<544x16xf32> to vector<32x16xf32>
    %106 = arith.truncf %105 : vector<32x16xf32> to vector<32x16xbf16>
    %c0_47 = arith.constant 0 : index
    %c112 = arith.constant 112 : index
    %107 = vector.load %arg10[%c0_47, %c112] : memref<32x272xbf16, #tpu.memory_space<vmem>>, vector<32x16xbf16>
    tpu.vector_store %arg10[%c0_47, %c112], %106 {strides = array<i32>} : memref<32x272xbf16, #tpu.memory_space<vmem>>, vector<32x16xbf16>,
    %108 = vector.extract_strided_slice %83 {offsets = [256, 0], sizes = [32, 16], strides = [1, 1]} : vector<544x16xf32> to vector<32x16xf32>
    %109 = arith.truncf %108 : vector<32x16xf32> to vector<32x16xbf16>
    %c0_48 = arith.constant 0 : index
    %c128 = arith.constant 128 : index
    %110 = vector.load %arg10[%c0_48, %c128] : memref<32x272xbf16, #tpu.memory_space<vmem>>, vector<32x16xbf16>
    tpu.vector_store %arg10[%c0_48, %c128], %109 {strides = array<i32>} : memref<32x272xbf16, #tpu.memory_space<vmem>>, vector<32x16xbf16>,
    %111 = vector.extract_strided_slice %83 {offsets = [288, 0], sizes = [32, 16], strides = [1, 1]} : vector<544x16xf32> to vector<32x16xf32>
    %112 = arith.truncf %111 : vector<32x16xf32> to vector<32x16xbf16>
    %c0_49 = arith.constant 0 : index
    %c144 = arith.constant 144 : index
    %113 = vector.load %arg10[%c0_49, %c144] : memref<32x272xbf16, #tpu.memory_space<vmem>>, vector<32x16xbf16>
    tpu.vector_store %arg10[%c0_49, %c144], %112 {strides = array<i32>} : memref<32x272xbf16, #tpu.memory_space<vmem>>, vector<32x16xbf16>,
    %114 = vector.extract_strided_slice %83 {offsets = [320, 0], sizes = [32, 16], strides = [1, 1]} : vector<544x16xf32> to vector<32x16xf32>
    %115 = arith.truncf %114 : vector<32x16xf32> to vector<32x16xbf16>
    %c0_50 = arith.constant 0 : index
    %c160 = arith.constant 160 : index
    %116 = vector.load %arg10[%c0_50, %c160] : memref<32x272xbf16, #tpu.memory_space<vmem>>, vector<32x16xbf16>
    tpu.vector_store %arg10[%c0_50, %c160], %115 {strides = array<i32>} : memref<32x272xbf16, #tpu.memory_space<vmem>>, vector<32x16xbf16>,
    %117 = vector.extract_strided_slice %83 {offsets = [352, 0], sizes = [32, 16], strides = [1, 1]} : vector<544x16xf32> to vector<32x16xf32>
    %118 = arith.truncf %117 : vector<32x16xf32> to vector<32x16xbf16>
    %c0_51 = arith.constant 0 : index
    %c176 = arith.constant 176 : index
    %119 = vector.load %arg10[%c0_51, %c176] : memref<32x272xbf16, #tpu.memory_space<vmem>>, vector<32x16xbf16>
    tpu.vector_store %arg10[%c0_51, %c176], %118 {strides = array<i32>} : memref<32x272xbf16, #tpu.memory_space<vmem>>, vector<32x16xbf16>,
    %120 = vector.extract_strided_slice %83 {offsets = [384, 0], sizes = [32, 16], strides = [1, 1]} : vector<544x16xf32> to vector<32x16xf32>
    %121 = arith.truncf %120 : vector<32x16xf32> to vector<32x16xbf16>
    %c0_52 = arith.constant 0 : index
    %c192 = arith.constant 192 : index
    %122 = vector.load %arg10[%c0_52, %c192] : memref<32x272xbf16, #tpu.memory_space<vmem>>, vector<32x16xbf16>
    tpu.vector_store %arg10[%c0_52, %c192], %121 {strides = array<i32>} : memref<32x272xbf16, #tpu.memory_space<vmem>>, vector<32x16xbf16>,
    %123 = vector.extract_strided_slice %83 {offsets = [416, 0], sizes = [32, 16], strides = [1, 1]} : vector<544x16xf32> to vector<32x16xf32>
    %124 = arith.truncf %123 : vector<32x16xf32> to vector<32x16xbf16>
    %c0_53 = arith.constant 0 : index
    %c208 = arith.constant 208 : index
    %125 = vector.load %arg10[%c0_53, %c208] : memref<32x272xbf16, #tpu.memory_space<vmem>>, vector<32x16xbf16>
    tpu.vector_store %arg10[%c0_53, %c208], %124 {strides = array<i32>} : memref<32x272xbf16, #tpu.memory_space<vmem>>, vector<32x16xbf16>,
    %126 = vector.extract_strided_slice %83 {offsets = [448, 0], sizes = [32, 16], strides = [1, 1]} : vector<544x16xf32> to vector<32x16xf32>
    %127 = arith.truncf %126 : vector<32x16xf32> to vector<32x16xbf16>
    %c0_54 = arith.constant 0 : index
    %c224 = arith.constant 224 : index
    %128 = vector.load %arg10[%c0_54, %c224] : memref<32x272xbf16, #tpu.memory_space<vmem>>, vector<32x16xbf16>
    tpu.vector_store %arg10[%c0_54, %c224], %127 {strides = array<i32>} : memref<32x272xbf16, #tpu.memory_space<vmem>>, vector<32x16xbf16>,
    %129 = vector.extract_strided_slice %83 {offsets = [480, 0], sizes = [32, 16], strides = [1, 1]} : vector<544x16xf32> to vector<32x16xf32>
    %130 = arith.truncf %129 : vector<32x16xf32> to vector<32x16xbf16>
    %c0_55 = arith.constant 0 : index
    %c240 = arith.constant 240 : index
    %131 = vector.load %arg10[%c0_55, %c240] : memref<32x272xbf16, #tpu.memory_space<vmem>>, vector<32x16xbf16>
    tpu.vector_store %arg10[%c0_55, %c240], %130 {strides = array<i32>} : memref<32x272xbf16, #tpu.memory_space<vmem>>, vector<32x16xbf16>,
    %132 = vector.extract_strided_slice %83 {offsets = [512, 0], sizes = [32, 16], strides = [1, 1]} : vector<544x16xf32> to vector<32x16xf32>
    %133 = arith.truncf %132 : vector<32x16xf32> to vector<32x16xbf16>
    %c0_56 = arith.constant 0 : index
    %c256 = arith.constant 256 : index
    %134 = vector.load %arg10[%c0_56, %c256] : memref<32x272xbf16, #tpu.memory_space<vmem>>, vector<32x16xbf16>
    tpu.vector_store %arg10[%c0_56, %c256], %133 {strides = array<i32>} : memref<32x272xbf16, #tpu.memory_space<vmem>>, vector<32x16xbf16>,
    %c0_57 = arith.constant 0 : index
    %c0_58 = arith.constant 0 : index
    %135 = vector.load %arg10[%c0_57, %c0_58] : memref<32x272xbf16, #tpu.memory_space<vmem>>, vector<32x272xbf16>
    %c0_59 = arith.constant 0 : index
    %c0_60 = arith.constant 0 : index
    %136 = vector.load %arg4[%c0_59, %c0_60] : memref<272x8xf32, #tpu.memory_space<vmem>>, vector<272x8xf32>
    %137 = arith.truncf %136 : vector<272x8xf32> to vector<272x8xbf16>
    %cst_61 = arith.constant dense<0.000000e+00> : vector<32x8xf32>
    %138 = tpu.matmul %135, %137, %cst_61 {dimension_numbers = #tpu.dot_dimension_numbers<[1], [0], [0], [1], [0, 0, 1, 1], [], []>} : vector<32x272xbf16>, vector<272x8xbf16>, vector<32x8xf32> -> vector<32x8xf32>
    %c0_62 = arith.constant 0 : index
    %c0_63 = arith.constant 0 : index
    %139 = vector.load %arg5[%c0_62, %c0_63] : memref<1x8xf32, #tpu.memory_space<vmem>>, vector<1x8xf32>
    %140 = vector.broadcast %139 : vector<1x8xf32> to vector<32x8xf32>
    %141 = arith.addf %138, %140 : vector<32x8xf32>
    %cst_64 = arith.constant dense<0.000000e+00> : vector<8xf32>
    %142 = vector.multi_reduction <add>, %141, %cst_64 [0] : vector<32x8xf32> to vector<8xf32>
    %143 = vector.shape_cast %142 : vector<8xf32> to vector<1x8xf32>
    %cst_65 = arith.constant 3.200000e+01 : f32
    %144 = vector.broadcast %cst_65 : f32 to vector<1x8xf32>
    %145 = arith.divf %143, %144 : vector<1x8xf32>
    %146 = vector.broadcast %145 : vector<1x8xf32> to vector<32x8xf32>
    %147 = arith.subf %141, %146 : vector<32x8xf32>
    %148 = arith.mulf %147, %147 : vector<32x8xf32>
    %cst_66 = arith.constant dense<0.000000e+00> : vector<8xf32>
    %149 = vector.multi_reduction <add>, %148, %cst_66 [0] : vector<32x8xf32> to vector<8xf32>
    %150 = vector.shape_cast %149 : vector<8xf32> to vector<1x8xf32>
    %cst_67 = arith.constant 3.200000e+01 : f32
    %151 = vector.broadcast %cst_67 : f32 to vector<1x8xf32>
    %152 = arith.divf %150, %151 : vector<1x8xf32>
    %153 = vector.broadcast %145 : vector<1x8xf32> to vector<32x8xf32>
    %154 = arith.subf %141, %153 : vector<32x8xf32>
    %cst_68 = arith.constant 9.99999974E-6 : f32
    %155 = vector.broadcast %cst_68 : f32 to vector<1x8xf32>
    %156 = arith.addf %152, %155 : vector<1x8xf32>
    %157 = math.rsqrt %156 : vector<1x8xf32>
    %158 = vector.broadcast %157 : vector<1x8xf32> to vector<32x8xf32>
    %159 = arith.mulf %154, %158 : vector<32x8xf32>
    %cst_69 = arith.constant 0.000000e+00 : f32
    %160 = vector.broadcast %cst_69 : f32 to vector<32x8xf32>
    %161 = arith.maximumf %159, %160 : vector<32x8xf32>
    %162 = arith.truncf %161 : vector<32x8xf32> to vector<32x8xbf16>
    %c0_70 = arith.constant 0 : index
    %c0_71 = arith.constant 0 : index
    %163 = vector.load %arg6[%c0_70, %c0_71] : memref<8x4xf32, #tpu.memory_space<vmem>>, vector<8x4xf32>
    %164 = arith.truncf %163 : vector<8x4xf32> to vector<8x4xbf16>
    %cst_72 = arith.constant dense<0.000000e+00> : vector<32x4xf32>
    %165 = tpu.matmul %162, %164, %cst_72 {dimension_numbers = #tpu.dot_dimension_numbers<[1], [0], [0], [1], [0, 0, 1, 1], [], []>} : vector<32x8xbf16>, vector<8x4xbf16>, vector<32x4xf32> -> vector<32x4xf32>
    %c0_73 = arith.constant 0 : index
    %c0_74 = arith.constant 0 : index
    %166 = vector.load %arg7[%c0_73, %c0_74] : memref<1x4xf32, #tpu.memory_space<vmem>>, vector<1x4xf32>
    %167 = vector.broadcast %166 : vector<1x4xf32> to vector<32x4xf32>
    %168 = arith.addf %165, %167 : vector<32x4xf32>
    %c0_75 = arith.constant 0 : index
    %c0_76 = arith.constant 0 : index
    %169 = vector.load %arg8[%c0_75, %c0_76] : memref<32x4xf32, #tpu.memory_space<vmem>>, vector<32x4xf32>
    tpu.vector_store %arg8[%c0_75, %c0_76], %168 {strides = array<i32>} : memref<32x4xf32, #tpu.memory_space<vmem>>, vector<32x4xf32>,
    return
  }
}

</mosaic_0001>

<llo_original>
// kernel: tpu_custom_call.1
$region0: #{tpu_custom_call.1}
  #allocation0 [shape = 'u32[]', space=smem, size = 0x4, offset = 0x4, fixed_abs, tag = 'smem constant byte address 0x4 - core index']
  #allocation1 [shape = 'u32[144,128]{1,0:T(1,128)}', space=vmem, size = 0x12000, scoped, tag = 'internal scratch']
  #allocation2 [shape = 'bf16[32,68]{1,0:T(16,128)(2,1)}', space=vmem, size = 0x2000, scoped, tag = 'scratch operand']
  #allocation3 [shape = 'bf16[32,272]{1,0:T(16,128)(2,1)}', space=vmem, size = 0x6000, scoped, tag = 'scratch operand']
  %s0 = inlined_call_operand.vmem [shape: bf16[544,32], index: 0, kind: input, shape index: {}]
  %s1 = inlined_call_operand.vmem [shape: f32[32,4], index: 1, kind: input, shape index: {}]
  %s2 = inlined_call_operand.vmem [shape: f32[68,16], index: 2, kind: input, shape index: {}]
  %s3 = inlined_call_operand.vmem [shape: f32[1,16], index: 3, kind: input, shape index: {}]
  %s4 = inlined_call_operand.vmem [shape: f32[272,8], index: 4, kind: input, shape index: {}]
  %s5 = inlined_call_operand.vmem [shape: f32[1,8], index: 5, kind: input, shape index: {}]
  %s6 = inlined_call_operand.vmem [shape: f32[8,4], index: 6, kind: input, shape index: {}]
  %s7 = inlined_call_operand.vmem [shape: f32[1,4], index: 7, kind: input, shape index: {}]
  %s8 = inlined_call_operand.vmem [shape: f32[32,4], index: 8, kind: output, shape index: {}]
  %s9 = sld [smem:[#allocation0]]
  $region42: #{tpu_custom_call.1} parent=0
    _
  %s11 = ssub.s32 1, %s9
  %s12 = scalar_select 0, %s11, %s9
  // Predicated region
  $region2: #{tpu_custom_call.1} parent=0 // pred_check
    _
  $region3: #{tpu_custom_call.1} parent=0 // pred_check_branch
    %14 = sbr.rel (0) target = $region5
  $region4: #{tpu_custom_call.1} parent=0 // pred_region
    _
  $region5: #{tpu_custom_call.1} parent=0 // pred_fallthru
    _
  // Predicated region
  $region6: #{tpu_custom_call.1} parent=0 // pred_check
    _
  $region7: #{tpu_custom_call.1} parent=0 // pred_check_branch
    %16 = sbr.rel (0) target = $region9
  $region8: #{tpu_custom_call.1} parent=0 // pred_region
    _
  $region9: #{tpu_custom_call.1} parent=0 // pred_fallthru
    _
  // Predicated region
  $region10: #{tpu_custom_call.1} parent=0 // pred_check
    _
  $region11: #{tpu_custom_call.1} parent=0 // pred_check_branch
    %18 = sbr.rel (0) target = $region13
  $region12: #{tpu_custom_call.1} parent=0 // pred_region
    _
  $region13: #{tpu_custom_call.1} parent=0 // pred_fallthru
    _
  // Predicated region
  $region14: #{tpu_custom_call.1} parent=0 // pred_check
    _
  $region15: #{tpu_custom_call.1} parent=0 // pred_check_branch
    %20 = sbr.rel (0) target = $region17
  $region16: #{tpu_custom_call.1} parent=0 // pred_region
    _
  $region17: #{tpu_custom_call.1} parent=0 // pred_fallthru
    _
  // Predicated region
  $region18: #{tpu_custom_call.1} parent=0 // pred_check
    _
  $region19: #{tpu_custom_call.1} parent=0 // pred_check_branch
    %22 = sbr.rel (0) target = $region21
  $region20: #{tpu_custom_call.1} parent=0 // pred_region
    _
  $region21: #{tpu_custom_call.1} parent=0 // pred_fallthru
    _
  // Predicated region
  $region22: #{tpu_custom_call.1} parent=0 // pred_check
    _
  $region23: #{tpu_custom_call.1} parent=0 // pred_check_branch
    %24 = sbr.rel (0) target = $region25
  $region24: #{tpu_custom_call.1} parent=0 // pred_region
    _
  $region25: #{tpu_custom_call.1} parent=0 // pred_fallthru
    _
  // Predicated region
  $region26: #{tpu_custom_call.1} parent=0 // pred_check
    _
  $region27: #{tpu_custom_call.1} parent=0 // pred_check_branch
    %26 = sbr.rel (0) target = $region29
  $region28: #{tpu_custom_call.1} parent=0 // pred_region
    _
  $region29: #{tpu_custom_call.1} parent=0 // pred_fallthru
    _
  // Predicated region
  $region30: #{tpu_custom_call.1} parent=0 // pred_check
    _
  $region31: #{tpu_custom_call.1} parent=0 // pred_check_branch
    %28 = sbr.rel (0) target = $region33
  $region32: #{tpu_custom_call.1} parent=0 // pred_region
    _
  $region33: #{tpu_custom_call.1} parent=0 // pred_fallthru
    _
  %v30 = vld [vmem:[%s0] sm:$0xf]
  %v31 = vld [vmem:[%s0 + $0x4] sm:$0xf]
  %v32 = vld [vmem:[%s0 + $0x8] sm:$0xf]
  %v33 = vld [vmem:[%s0 + $0xc] sm:$0xf]
  %v34 = vld [vmem:[%s0 + $0x10] sm:$0xf]
  %v35 = vld [vmem:[%s0 + $0x14] sm:$0xf]
  %v36 = vld [vmem:[%s0 + $0x18] sm:$0xf]
  %v37 = vld [vmem:[%s0 + $0x1c] sm:$0xf]
  %v38 = vld [vmem:[%s0 + $0x20] sm:$0xf]
  %v39 = vld [vmem:[%s0 + $0x24] sm:$0xf]
  %v40 = vld [vmem:[%s0 + $0x28] sm:$0xf]
  %v41 = vld [vmem:[%s0 + $0x2c] sm:$0xf]
  %v42 = vld [vmem:[%s0 + $0x30] sm:$0xf]
  %v43 = vld [vmem:[%s0 + $0x34] sm:$0xf]
  %v44 = vld [vmem:[%s0 + $0x38] sm:$0xf]
  %v45 = vld [vmem:[%s0 + $0x3c] sm:$0xf]
  %v46 = vld [vmem:[%s0 + $0x40] sm:$0xf]
  %v47 = vld [vmem:[%s0 + $0x44] sm:$0xf]
  %v48 = vld [vmem:[%s0 + $0x48] sm:$0xf]
  %v49 = vld [vmem:[%s0 + $0x4c] sm:$0xf]
  %v50 = vld [vmem:[%s0 + $0x50] sm:$0xf]
  %v51 = vld [vmem:[%s0 + $0x54] sm:$0xf]
  %v52 = vld [vmem:[%s0 + $0x58] sm:$0xf]
  %v53 = vld [vmem:[%s0 + $0x5c] sm:$0xf]
  %v54 = vld [vmem:[%s0 + $0x60] sm:$0xf]
  %v55 = vld [vmem:[%s0 + $0x64] sm:$0xf]
  %v56 = vld [vmem:[%s0 + $0x68] sm:$0xf]
  %v57 = vld [vmem:[%s0 + $0x6c] sm:$0xf]
  %v58 = vld [vmem:[%s0 + $0x70] sm:$0xf]
  %v59 = vld [vmem:[%s0 + $0x74] sm:$0xf]
  %v60 = vld [vmem:[%s0 + $0x78] sm:$0xf]
  %v61 = vld [vmem:[%s0 + $0x7c] sm:$0xf]
  %v62 = vld [vmem:[%s0 + $0x80] sm:$0xf]
  %v63 = vld [vmem:[%s0 + $0x84] sm:$0xf]
  %v64 = vld [vmem:[%s0 + $0x88] sm:$0xf]
  %v65 = vld [vmem:[%s0 + $0x8c] sm:$0xf]
  %v66 = vld [vmem:[%s0 + $0x90] sm:$0xf]
  %v67 = vld [vmem:[%s0 + $0x94] sm:$0xf]
  %v68 = vld [vmem:[%s0 + $0x98] sm:$0xf]
  %v69 = vld [vmem:[%s0 + $0x9c] sm:$0xf]
  %v70 = vld [vmem:[%s0 + $0xa0] sm:$0xf]
  %v71 = vld [vmem:[%s0 + $0xa4] sm:$0xf]
  %v72 = vld [vmem:[%s0 + $0xa8] sm:$0xf]
  %v73 = vld [vmem:[%s0 + $0xac] sm:$0xf]
  %v74 = vld [vmem:[%s0 + $0xb0] sm:$0xf]
  %v75 = vld [vmem:[%s0 + $0xb4] sm:$0xf]
  %v76 = vld [vmem:[%s0 + $0xb8] sm:$0xf]
  %v77 = vld [vmem:[%s0 + $0xbc] sm:$0xf]
  %v78 = vld [vmem:[%s0 + $0xc0] sm:$0xf]
  %v79 = vld [vmem:[%s0 + $0xc4] sm:$0xf]
  %v80 = vld [vmem:[%s0 + $0xc8] sm:$0xf]
  %v81 = vld [vmem:[%s0 + $0xcc] sm:$0xf]
  %v82 = vld [vmem:[%s0 + $0xd0] sm:$0xf]
  %v83 = vld [vmem:[%s0 + $0xd4] sm:$0xf]
  %v84 = vld [vmem:[%s0 + $0xd8] sm:$0xf]
  %v85 = vld [vmem:[%s0 + $0xdc] sm:$0xf]
  %v86 = vld [vmem:[%s0 + $0xe0] sm:$0xf]
  %v87 = vld [vmem:[%s0 + $0xe4] sm:$0xf]
  %v88 = vld [vmem:[%s0 + $0xe8] sm:$0xf]
  %v89 = vld [vmem:[%s0 + $0xec] sm:$0xf]
  %v90 = vld [vmem:[%s0 + $0xf0] sm:$0xf]
  %v91 = vld [vmem:[%s0 + $0xf4] sm:$0xf]
  %v92 = vld [vmem:[%s0 + $0xf8] sm:$0xf]
  %v93 = vld [vmem:[%s0 + $0xfc] sm:$0xf]
  %v94 = vld [vmem:[%s0 + $0x100] sm:$0xf]
  %v95 = vld [vmem:[%s0 + $0x104] sm:$0xf]
  %v96 = vld [vmem:[%s0 + $0x108] sm:$0xf]
  %v97 = vld [vmem:[%s0 + $0x10c] sm:$0xf]
  %v98 = vld [vmem:[%s1] sm:$0xff]
  %v99 = vld [vmem:[%s1 + $0x8] sm:$0xff]
  %v100 = vld [vmem:[%s1 + $0x10] sm:$0xff]
  %v101 = vld [vmem:[%s1 + $0x18] sm:$0xff]
  %v102 = vpack.c.bf16 %v99, %v98
  %v103 = vpack.c.bf16 %v101, %v100
  %v172 = vunpack.c.l.b16 %v30
  %v173 = vunpack.c.l.b16 %v31
  %v174 = vunpack.c.l.b16 %v32
  %v175 = vunpack.c.l.b16 %v33
  %v176 = vunpack.c.l.b16 %v34
  %v177 = vunpack.c.l.b16 %v35
  %v178 = vunpack.c.l.b16 %v36
  %v179 = vunpack.c.l.b16 %v37
  %v180 = vunpack.c.l.b16 %v38
  %v181 = vunpack.c.l.b16 %v39
  %v182 = vunpack.c.l.b16 %v40
  %v183 = vunpack.c.l.b16 %v41
  %v184 = vunpack.c.l.b16 %v42
  %v185 = vunpack.c.l.b16 %v43
  %v186 = vunpack.c.l.b16 %v44
  %v187 = vunpack.c.l.b16 %v45
  %v188 = vunpack.c.l.b16 %v46
  %v189 = vunpack.c.l.b16 %v47
  %v190 = vunpack.c.l.b16 %v48
  %v191 = vunpack.c.l.b16 %v49
  %v192 = vunpack.c.l.b16 %v50
  %v193 = vunpack.c.l.b16 %v51
  %v194 = vunpack.c.l.b16 %v52
  %v195 = vunpack.c.l.b16 %v53
  %v196 = vunpack.c.l.b16 %v54
  %v197 = vunpack.c.l.b16 %v55
  %v198 = vunpack.c.l.b16 %v56
  %v199 = vunpack.c.l.b16 %v57
  %v200 = vunpack.c.l.b16 %v58
  %v201 = vunpack.c.l.b16 %v59
  %v202 = vunpack.c.l.b16 %v60
  %v203 = vunpack.c.l.b16 %v61
  %v204 = vunpack.c.l.b16 %v62
  %v205 = vunpack.c.l.b16 %v63
  %v206 = vunpack.c.l.b16 %v64
  %v207 = vunpack.c.l.b16 %v65
  %v208 = vunpack.c.l.b16 %v66
  %v209 = vunpack.c.l.b16 %v67
  %v210 = vunpack.c.l.b16 %v68
  %v211 = vunpack.c.l.b16 %v69
  %v212 = vunpack.c.l.b16 %v70
  %v213 = vunpack.c.l.b16 %v71
  %v214 = vunpack.c.l.b16 %v72
  %v215 = vunpack.c.l.b16 %v73
  %v216 = vunpack.c.l.b16 %v74
  %v217 = vunpack.c.l.b16 %v75
  %v218 = vunpack.c.l.b16 %v76
  %v219 = vunpack.c.l.b16 %v77
  %v220 = vunpack.c.l.b16 %v78
  %v221 = vunpack.c.l.b16 %v79
  %v222 = vunpack.c.l.b16 %v80
  %v223 = vunpack.c.l.b16 %v81
  %v224 = vunpack.c.l.b16 %v82
  %v225 = vunpack.c.l.b16 %v83
  %v226 = vunpack.c.l.b16 %v84
  %v227 = vunpack.c.l.b16 %v85
  %v228 = vunpack.c.l.b16 %v86
  %v229 = vunpack.c.l.b16 %v87
  %v230 = vunpack.c.l.b16 %v88
  %v231 = vunpack.c.l.b16 %v89
  %v232 = vunpack.c.l.b16 %v90
  %v233 = vunpack.c.l.b16 %v91
  %v234 = vunpack.c.l.b16 %v92
  %v235 = vunpack.c.l.b16 %v93
  %v236 = vunpack.c.l.b16 %v94
  %v237 = vunpack.c.l.b16 %v95
  %v238 = vunpack.c.l.b16 %v96
  %v239 = vunpack.c.l.b16 %v97
  %v240 = vpack.c.b16 %v173, %v172
  %v241 = vpack.c.b16 %v175, %v174
  %v242 = vpack.c.b16 %v177, %v176
  %v243 = vpack.c.b16 %v179, %v178
  %v244 = vpack.c.b16 %v181, %v180
  %v245 = vpack.c.b16 %v183, %v182
  %v246 = vpack.c.b16 %v185, %v184
  %v247 = vpack.c.b16 %v187, %v186
  %v248 = vpack.c.b16 %v189, %v188
  %v249 = vpack.c.b16 %v191, %v190
  %v250 = vpack.c.b16 %v193, %v192
  %v251 = vpack.c.b16 %v195, %v194
  %v252 = vpack.c.b16 %v197, %v196
  %v253 = vpack.c.b16 %v199, %v198
  %v254 = vpack.c.b16 %v201, %v200
  %v255 = vpack.c.b16 %v203, %v202
  %v256 = vpack.c.b16 %v205, %v204
  %v257 = vpack.c.b16 %v207, %v206
  %v258 = vpack.c.b16 %v209, %v208
  %v259 = vpack.c.b16 %v211, %v210
  %v260 = vpack.c.b16 %v213, %v212
  %v261 = vpack.c.b16 %v215, %v214
  %v262 = vpack.c.b16 %v217, %v216
  %v263 = vpack.c.b16 %v219, %v218
  %v264 = vpack.c.b16 %v221, %v220
  %v265 = vpack.c.b16 %v223, %v222
  %v266 = vpack.c.b16 %v225, %v224
  %v267 = vpack.c.b16 %v227, %v226
  %v268 = vpack.c.b16 %v229, %v228
  %v269 = vpack.c.b16 %v231, %v230
  %v270 = vpack.c.b16 %v233, %v232
  %v271 = vpack.c.b16 %v235, %v234
  %v272 = vpack.c.b16 %v237, %v236
  %v273 = vpack.c.b16 %v239, %v238
  %vm274 = vcmask 261120
  %v276 = vsel %vm274, %v240, 0
  %v279 = vsel %vm274, %v241, 0
  %v282 = vsel %vm274, %v242, 0
  %v285 = vsel %vm274, %v243, 0
  %v288 = vsel %vm274, %v244, 0
  %v291 = vsel %vm274, %v245, 0
  %v294 = vsel %vm274, %v246, 0
  %v297 = vsel %vm274, %v247, 0
  %v300 = vsel %vm274, %v248, 0
  %v303 = vsel %vm274, %v249, 0
  %v306 = vsel %vm274, %v250, 0
  %v309 = vsel %vm274, %v251, 0
  %v312 = vsel %vm274, %v252, 0
  %v315 = vsel %vm274, %v253, 0
  %v318 = vsel %vm274, %v254, 0
  %v321 = vsel %vm274, %v255, 0
  %v324 = vsel %vm274, %v256, 0
  %v327 = vsel %vm274, %v257, 0
  %v330 = vsel %vm274, %v258, 0
  %v333 = vsel %vm274, %v259, 0
  %v336 = vsel %vm274, %v260, 0
  %v339 = vsel %vm274, %v261, 0
  %v342 = vsel %vm274, %v262, 0
  %v345 = vsel %vm274, %v263, 0
  %v348 = vsel %vm274, %v264, 0
  %v351 = vsel %vm274, %v265, 0
  %v354 = vsel %vm274, %v266, 0
  %v357 = vsel %vm274, %v267, 0
  %v360 = vsel %vm274, %v268, 0
  %v363 = vsel %vm274, %v269, 0
  %v366 = vsel %vm274, %v270, 0
  %v369 = vsel %vm274, %v271, 0
  %v372 = vsel %vm274, %v272, 0
  %v375 = vsel %vm274, %v273, 0
  %377 = vmatprep.subr.bf16.mxu0 0
  %378 = vmatpush1.bf16.msra.mxu0 %v102
  %379 = vmatprep.subr.bf16.mxu0 0
  %380 = vmatpush1.bf16.msra.mxu0 %v103
  %381 = vmatprep.subr.bf16.mxu0 0
  %382 = vmatpush1.bf16.msra.mxu0 0
  %383 = vmatprep.subr.bf16.mxu0 0
  %384 = vmatpush1.bf16.msra.mxu0 0
  %385 = vmatprep.subr.bf16.mxu0 0
  %386 = vmatpush1.bf16.msra.mxu0 0
  %387 = vmatprep.subr.bf16.mxu0 0
  %388 = vmatpush1.bf16.msra.mxu0 0
  %389 = vmatprep.subr.bf16.mxu0 0
  %390 = vmatpush1.bf16.msra.mxu0 0
  %391 = vmatprep.subr.bf16.mxu0 0
  %392 = vmatpush1.bf16.msra.mxu0 0
  %393 = vmatprep.subr.bf16.mxu0 0
  %394 = vmatpush1.bf16.msra.mxu0 0
  %395 = vmatprep.subr.bf16.mxu0 0
  %396 = vmatpush1.bf16.msra.mxu0 0
  %397 = vmatprep.subr.bf16.mxu0 0
  %398 = vmatpush1.bf16.msra.mxu0 0
  %399 = vmatprep.subr.bf16.mxu0 0
  %400 = vmatpush1.bf16.msra.mxu0 0
  %401 = vmatprep.subr.bf16.mxu0 0
  %402 = vmatpush1.bf16.msra.mxu0 0
  %403 = vmatprep.subr.bf16.mxu0 0
  %404 = vmatpush1.bf16.msra.mxu0 0
  %405 = vmatprep.subr.bf16.mxu0 0
  %406 = vmatpush1.bf16.msra.mxu0 0
  %407 = vmatprep.subr.bf16.mxu0 0
  %408 = vmatpush1.bf16.msra.mxu0 0
  %409 = vmatprep.mubr.bf16.mxu0 0
  %410 = vmatmul.mubr.bf16.gmra.mrb[0].mxu0 %v276
  %v411 = vpop.f32.mrb[0].mxu0
  %v412 = vadd.f32 0.0, %v411
  %v413 = vpop.f32.mrb[0].mxu0
  %v414 = vpop.f32.mrb[0].mxu0
  %v415 = vadd.f32 0.0, %v414
  %v416 = vpop.f32.mrb[0].mxu0
  %417 = vmatprep.mubr.bf16.mxu0 0
  %418 = vmatmul.mubr.bf16.gmra.mrb[0].mxu0 %v279
  %v419 = vpop.f32.mrb[0].mxu0
  %v420 = vadd.f32 0.0, %v419
  %v421 = vpop.f32.mrb[0].mxu0
  %v422 = vpop.f32.mrb[0].mxu0
  %v423 = vadd.f32 0.0, %v422
  %v424 = vpop.f32.mrb[0].mxu0
  %425 = vmatprep.mubr.bf16.mxu0 0
  %426 = vmatmul.mubr.bf16.gmra.mrb[0].mxu0 %v282
  %v427 = vpop.f32.mrb[0].mxu0
  %v428 = vadd.f32 0.0, %v427
  %v429 = vpop.f32.mrb[0].mxu0
  %v430 = vpop.f32.mrb[0].mxu0
  %v431 = vadd.f32 0.0, %v430
  %v432 = vpop.f32.mrb[0].mxu0
  %433 = vmatprep.mubr.bf16.mxu0 0
  %434 = vmatmul.mubr.bf16.gmra.mrb[0].mxu0 %v285
  %v435 = vpop.f32.mrb[0].mxu0
  %v436 = vadd.f32 0.0, %v435
  %v437 = vpop.f32.mrb[0].mxu0
  %v438 = vpop.f32.mrb[0].mxu0
  %v439 = vadd.f32 0.0, %v438
  %v440 = vpop.f32.mrb[0].mxu0
  %441 = vmatprep.mubr.bf16.mxu0 0
  %442 = vmatmul.mubr.bf16.gmra.mrb[0].mxu0 %v288
  %v443 = vpop.f32.mrb[0].mxu0
  %v444 = vadd.f32 0.0, %v443
  %v445 = vpop.f32.mrb[0].mxu0
  %v446 = vpop.f32.mrb[0].mxu0
  %v447 = vadd.f32 0.0, %v446
  %v448 = vpop.f32.mrb[0].mxu0
  %449 = vmatprep.mubr.bf16.mxu0 0
  %450 = vmatmul.mubr.bf16.gmra.mrb[0].mxu0 %v291
  %v451 = vpop.f32.mrb[0].mxu0
  %v452 = vadd.f32 0.0, %v451
  %v453 = vpop.f32.mrb[0].mxu0
  %v454 = vpop.f32.mrb[0].mxu0
  %v455 = vadd.f32 0.0, %v454
  %v456 = vpop.f32.mrb[0].mxu0
  %457 = vmatprep.mubr.bf16.mxu0 0
  %458 = vmatmul.mubr.bf16.gmra.mrb[0].mxu0 %v294
  %v459 = vpop.f32.mrb[0].mxu0
  %v460 = vadd.f32 0.0, %v459
  %v461 = vpop.f32.mrb[0].mxu0
  %v462 = vpop.f32.mrb[0].mxu0
  %v463 = vadd.f32 0.0, %v462
  %v464 = vpop.f32.mrb[0].mxu0
  %465 = vmatprep.mubr.bf16.mxu0 0
  %466 = vmatmul.mubr.bf16.gmra.mrb[0].mxu0 %v297
  %v467 = vpop.f32.mrb[0].mxu0
  %v468 = vadd.f32 0.0, %v467
  %v469 = vpop.f32.mrb[0].mxu0
  %v470 = vpop.f32.mrb[0].mxu0
  %v471 = vadd.f32 0.0, %v470
  %v472 = vpop.f32.mrb[0].mxu0
  %473 = vmatprep.mubr.bf16.mxu0 0
  %474 = vmatmul.mubr.bf16.gmra.mrb[0].mxu0 %v300
  %v475 = vpop.f32.mrb[0].mxu0
  %v476 = vadd.f32 0.0, %v475
  %v477 = vpop.f32.mrb[0].mxu0
  %v478 = vpop.f32.mrb[0].mxu0
  %v479 = vadd.f32 0.0, %v478
  %v480 = vpop.f32.mrb[0].mxu0
  %481 = vmatprep.mubr.bf16.mxu0 0
  %482 = vmatmul.mubr.bf16.gmra.mrb[0].mxu0 %v303
  %v483 = vpop.f32.mrb[0].mxu0
  %v484 = vadd.f32 0.0, %v483
  %v485 = vpop.f32.mrb[0].mxu0
  %v486 = vpop.f32.mrb[0].mxu0
  %v487 = vadd.f32 0.0, %v486
  %v488 = vpop.f32.mrb[0].mxu0
  %489 = vmatprep.mubr.bf16.mxu0 0
  %490 = vmatmul.mubr.bf16.gmra.mrb[0].mxu0 %v306
  %v491 = vpop.f32.mrb[0].mxu0
  %v492 = vadd.f32 0.0, %v491
  %v493 = vpop.f32.mrb[0].mxu0
  %v494 = vpop.f32.mrb[0].mxu0
  %v495 = vadd.f32 0.0, %v494
  %v496 = vpop.f32.mrb[0].mxu0
  %497 = vmatprep.mubr.bf16.mxu0 0
  %498 = vmatmul.mubr.bf16.gmra.mrb[0].mxu0 %v309
  %v499 = vpop.f32.mrb[0].mxu0
  %v500 = vadd.f32 0.0, %v499
  %v501 = vpop.f32.mrb[0].mxu0
  %v502 = vpop.f32.mrb[0].mxu0
  %v503 = vadd.f32 0.0, %v502
  %v504 = vpop.f32.mrb[0].mxu0
  %505 = vmatprep.mubr.bf16.mxu0 0
  %506 = vmatmul.mubr.bf16.gmra.mrb[0].mxu0 %v312
  %v507 = vpop.f32.mrb[0].mxu0
  %v508 = vadd.f32 0.0, %v507
  %v509 = vpop.f32.mrb[0].mxu0
  %v510 = vpop.f32.mrb[0].mxu0
  %v511 = vadd.f32 0.0, %v510
  %v512 = vpop.f32.mrb[0].mxu0
  %513 = vmatprep.mubr.bf16.mxu0 0
  %514 = vmatmul.mubr.bf16.gmra.mrb[0].mxu0 %v315
  %v515 = vpop.f32.mrb[0].mxu0
  %v516 = vadd.f32 0.0, %v515
  %v517 = vpop.f32.mrb[0].mxu0
  %v518 = vpop.f32.mrb[0].mxu0
  %v519 = vadd.f32 0.0, %v518
  %v520 = vpop.f32.mrb[0].mxu0
  %521 = vmatprep.mubr.bf16.mxu0 0
  %522 = vmatmul.mubr.bf16.gmra.mrb[0].mxu0 %v318
  %v523 = vpop.f32.mrb[0].mxu0
  %v524 = vadd.f32 0.0, %v523
  %v525 = vpop.f32.mrb[0].mxu0
  %v526 = vpop.f32.mrb[0].mxu0
  %v527 = vadd.f32 0.0, %v526
  %v528 = vpop.f32.mrb[0].mxu0
  %529 = vmatprep.mubr.bf16.mxu0 0
  %530 = vmatmul.mubr.bf16.gmra.mrb[0].mxu0 %v321
  %v531 = vpop.f32.mrb[0].mxu0
  %v532 = vadd.f32 0.0, %v531
  %v533 = vpop.f32.mrb[0].mxu0
  %v534 = vpop.f32.mrb[0].mxu0
  %v535 = vadd.f32 0.0, %v534
  %v536 = vpop.f32.mrb[0].mxu0
  %537 = vmatprep.mubr.bf16.mxu0 0
  %538 = vmatmul.mubr.bf16.gmra.mrb[0].mxu0 %v324
  %v539 = vpop.f32.mrb[0].mxu0
  %v540 = vadd.f32 0.0, %v539
  %v541 = vpop.f32.mrb[0].mxu0
  %v542 = vpop.f32.mrb[0].mxu0
  %v543 = vadd.f32 0.0, %v542
  %v544 = vpop.f32.mrb[0].mxu0
  %545 = vmatprep.mubr.bf16.mxu0 0
  %546 = vmatmul.mubr.bf16.gmra.mrb[0].mxu0 %v327
  %v547 = vpop.f32.mrb[0].mxu0
  %v548 = vadd.f32 0.0, %v547
  %v549 = vpop.f32.mrb[0].mxu0
  %v550 = vpop.f32.mrb[0].mxu0
  %v551 = vadd.f32 0.0, %v550
  %v552 = vpop.f32.mrb[0].mxu0
  %553 = vmatprep.mubr.bf16.mxu0 0
  %554 = vmatmul.mubr.bf16.gmra.mrb[0].mxu0 %v330
  %v555 = vpop.f32.mrb[0].mxu0
  %v556 = vadd.f32 0.0, %v555
  %v557 = vpop.f32.mrb[0].mxu0
  %v558 = vpop.f32.mrb[0].mxu0
  %v559 = vadd.f32 0.0, %v558
  %v560 = vpop.f32.mrb[0].mxu0
  %561 = vmatprep.mubr.bf16.mxu0 0
  %562 = vmatmul.mubr.bf16.gmra.mrb[0].mxu0 %v333
  %v563 = vpop.f32.mrb[0].mxu0
  %v564 = vadd.f32 0.0, %v563
  %v565 = vpop.f32.mrb[0].mxu0
  %v566 = vpop.f32.mrb[0].mxu0
  %v567 = vadd.f32 0.0, %v566
  %v568 = vpop.f32.mrb[0].mxu0
  %569 = vmatprep.mubr.bf16.mxu0 0
  %570 = vmatmul.mubr.bf16.gmra.mrb[0].mxu0 %v336
  %v571 = vpop.f32.mrb[0].mxu0
  %v572 = vadd.f32 0.0, %v571
  %v573 = vpop.f32.mrb[0].mxu0
  %v574 = vpop.f32.mrb[0].mxu0
  %v575 = vadd.f32 0.0, %v574
  %v576 = vpop.f32.mrb[0].mxu0
  %577 = vmatprep.mubr.bf16.mxu0 0
  %578 = vmatmul.mubr.bf16.gmra.mrb[0].mxu0 %v339
  %v579 = vpop.f32.mrb[0].mxu0
  %v580 = vadd.f32 0.0, %v579
  %v581 = vpop.f32.mrb[0].mxu0
  %v582 = vpop.f32.mrb[0].mxu0
  %v583 = vadd.f32 0.0, %v582
  %v584 = vpop.f32.mrb[0].mxu0
  %585 = vmatprep.mubr.bf16.mxu0 0
  %586 = vmatmul.mubr.bf16.gmra.mrb[0].mxu0 %v342
  %v587 = vpop.f32.mrb[0].mxu0
  %v588 = vadd.f32 0.0, %v587
  %v589 = vpop.f32.mrb[0].mxu0
  %v590 = vpop.f32.mrb[0].mxu0
  %v591 = vadd.f32 0.0, %v590
  %v592 = vpop.f32.mrb[0].mxu0
  %593 = vmatprep.mubr.bf16.mxu0 0
  %594 = vmatmul.mubr.bf16.gmra.mrb[0].mxu0 %v345
  %v595 = vpop.f32.mrb[0].mxu0
  %v596 = vadd.f32 0.0, %v595
  %v597 = vpop.f32.mrb[0].mxu0
  %v598 = vpop.f32.mrb[0].mxu0
  %v599 = vadd.f32 0.0, %v598
  %v600 = vpop.f32.mrb[0].mxu0
  %601 = vmatprep.mubr.bf16.mxu0 0
  %602 = vmatmul.mubr.bf16.gmra.mrb[0].mxu0 %v348
  %v603 = vpop.f32.mrb[0].mxu0
  %v604 = vadd.f32 0.0, %v603
  %v605 = vpop.f32.mrb[0].mxu0
  %v606 = vpop.f32.mrb[0].mxu0
  %v607 = vadd.f32 0.0, %v606
  %v608 = vpop.f32.mrb[0].mxu0
  %609 = vmatprep.mubr.bf16.mxu0 0
  %610 = vmatmul.mubr.bf16.gmra.mrb[0].mxu0 %v351
  %v611 = vpop.f32.mrb[0].mxu0
  %v612 = vadd.f32 0.0, %v611
  %v613 = vpop.f32.mrb[0].mxu0
  %v614 = vpop.f32.mrb[0].mxu0
  %v615 = vadd.f32 0.0, %v614
  %v616 = vpop.f32.mrb[0].mxu0
  %617 = vmatprep.mubr.bf16.mxu0 0
  %618 = vmatmul.mubr.bf16.gmra.mrb[0].mxu0 %v354
  %v619 = vpop.f32.mrb[0].mxu0
  %v620 = vadd.f32 0.0, %v619
  %v621 = vpop.f32.mrb[0].mxu0
  %v622 = vpop.f32.mrb[0].mxu0
  %v623 = vadd.f32 0.0, %v622
  %v624 = vpop.f32.mrb[0].mxu0
  %625 = vmatprep.mubr.bf16.mxu0 0
  %626 = vmatmul.mubr.bf16.gmra.mrb[0].mxu0 %v357
  %v627 = vpop.f32.mrb[0].mxu0
  %v628 = vadd.f32 0.0, %v627
  %v629 = vpop.f32.mrb[0].mxu0
  %v630 = vpop.f32.mrb[0].mxu0
  %v631 = vadd.f32 0.0, %v630
  %v632 = vpop.f32.mrb[0].mxu0
  %633 = vmatprep.mubr.bf16.mxu0 0
  %634 = vmatmul.mubr.bf16.gmra.mrb[0].mxu0 %v360
  %v635 = vpop.f32.mrb[0].mxu0
  %v636 = vadd.f32 0.0, %v635
  %v637 = vpop.f32.mrb[0].mxu0
  %v638 = vpop.f32.mrb[0].mxu0
  %v639 = vadd.f32 0.0, %v638
  %v640 = vpop.f32.mrb[0].mxu0
  %641 = vmatprep.mubr.bf16.mxu0 0
  %642 = vmatmul.mubr.bf16.gmra.mrb[0].mxu0 %v363
  %v643 = vpop.f32.mrb[0].mxu0
  %v644 = vadd.f32 0.0, %v643
  %v645 = vpop.f32.mrb[0].mxu0
  %v646 = vpop.f32.mrb[0].mxu0
  %v647 = vadd.f32 0.0, %v646
  %v648 = vpop.f32.mrb[0].mxu0
  %649 = vmatprep.mubr.bf16.mxu0 0
  %650 = vmatmul.mubr.bf16.gmra.mrb[0].mxu0 %v366
  %v651 = vpop.f32.mrb[0].mxu0
  %v652 = vadd.f32 0.0, %v651
  %v653 = vpop.f32.mrb[0].mxu0
  %v654 = vpop.f32.mrb[0].mxu0
  %v655 = vadd.f32 0.0, %v654
  %v656 = vpop.f32.mrb[0].mxu0
  %657 = vmatprep.mubr.bf16.mxu0 0
  %658 = vmatmul.mubr.bf16.gmra.mrb[0].mxu0 %v369
  %v659 = vpop.f32.mrb[0].mxu0
  %v660 = vadd.f32 0.0, %v659
  %v661 = vpop.f32.mrb[0].mxu0
  %v662 = vpop.f32.mrb[0].mxu0
  %v663 = vadd.f32 0.0, %v662
  %v664 = vpop.f32.mrb[0].mxu0
  %665 = vmatprep.mubr.bf16.mxu0 0
  %666 = vmatmul.mubr.bf16.gmra.mrb[0].mxu0 %v372
  %v667 = vpop.f32.mrb[0].mxu0
  %v668 = vadd.f32 0.0, %v667
  %v669 = vpop.f32.mrb[0].mxu0
  %v670 = vpop.f32.mrb[0].mxu0
  %v671 = vadd.f32 0.0, %v670
  %v672 = vpop.f32.mrb[0].mxu0
  %673 = vmatprep.mubr.bf16.mxu0 0
  %674 = vmatmul.mubr.bf16.gmra.mrb[0].mxu0 %v375
  %v675 = vpop.f32.mrb[0].mxu0
  %v676 = vadd.f32 0.0, %v675
  %v677 = vpop.f32.mrb[0].mxu0
  %v678 = vpop.f32.mrb[0].mxu0
  %v679 = vadd.f32 0.0, %v678
  %v680 = vpop.f32.mrb[0].mxu0
  %681 = vdwg.mxu0
  %v682 = vpack.c.bf16 %v415, %v412
  %v683 = vpack.c.bf16 %v423, %v420
  %vm684 = vcmask 31744
  %685 = vst.msk [vmem:[#allocation2] sm:$0xff] %vm684, %v682
  %686 = vst.msk [vmem:[#allocation2 + $0x8] sm:$0xff] %vm684, %v683
  %v687 = vpack.c.bf16 %v431, %v428
  %v688 = vpack.c.bf16 %v439, %v436
  %691 = vrot.lane.b32.xlu0 %v687, 4
  %v692 = vpop.permute.xlu0 %691
  %693 = vrot.lane.b32.xlu0 %v688, 4
  %v694 = vpop.permute.xlu0 %693
  %vm697 = vcmask 64544
  %698 = vst.msk [vmem:[#allocation2] sm:$0xff] %vm697, %v692
  %699 = vst.msk [vmem:[#allocation2 + $0x8] sm:$0xff] %vm697, %v694
  %v700 = vpack.c.bf16 %v447, %v444
  %v701 = vpack.c.bf16 %v455, %v452
  %704 = vrot.lane.b32.xlu0 %v700, 8
  %v705 = vpop.permute.xlu0 %704
  %706 = vrot.lane.b32.xlu0 %v701, 8
  %v707 = vpop.permute.xlu0 %706
  %vm710 = vcmask 97344
  %711 = vst.msk [vmem:[#allocation2] sm:$0xff] %vm710, %v705
  %712 = vst.msk [vmem:[#allocation2 + $0x8] sm:$0xff] %vm710, %v707
  %v713 = vpack.c.bf16 %v463, %v460
  %v714 = vpack.c.bf16 %v471, %v468
  %717 = vrot.lane.b32.xlu0 %v713, 12
  %v718 = vpop.permute.xlu0 %717
  %719 = vrot.lane.b32.xlu0 %v714, 12
  %v720 = vpop.permute.xlu0 %719
  %vm723 = vcmask 130144
  %724 = vst.msk [vmem:[#allocation2] sm:$0xff] %vm723, %v718
  %725 = vst.msk [vmem:[#allocation2 + $0x8] sm:$0xff] %vm723, %v720
  %v726 = vpack.c.bf16 %v479, %v476
  %v727 = vpack.c.bf16 %v487, %v484
  %730 = vrot.lane.b32.xlu0 %v726, 16
  %v731 = vpop.permute.xlu0 %730
  %732 = vrot.lane.b32.xlu0 %v727, 16
  %v733 = vpop.permute.xlu0 %732
  %vm736 = vcmask 162944
  %737 = vst.msk [vmem:[#allocation2] sm:$0xff] %vm736, %v731
  %738 = vst.msk [vmem:[#allocation2 + $0x8] sm:$0xff] %vm736, %v733
  %v739 = vpack.c.bf16 %v495, %v492
  %v740 = vpack.c.bf16 %v503, %v500
  %743 = vrot.lane.b32.xlu0 %v739, 20
  %v744 = vpop.permute.xlu0 %743
  %745 = vrot.lane.b32.xlu0 %v740, 20
  %v746 = vpop.permute.xlu0 %745
  %vm749 = vcmask 195744
  %750 = vst.msk [vmem:[#allocation2] sm:$0xff] %vm749, %v744
  %751 = vst.msk [vmem:[#allocation2 + $0x8] sm:$0xff] %vm749, %v746
  %v752 = vpack.c.bf16 %v511, %v508
  %v753 = vpack.c.bf16 %v519, %v516
  %756 = vrot.lane.b32.xlu0 %v752, 24
  %v757 = vpop.permute.xlu0 %756
  %758 = vrot.lane.b32.xlu0 %v753, 24
  %v759 = vpop.permute.xlu0 %758
  %vm762 = vcmask 228544
  %763 = vst.msk [vmem:[#allocation2] sm:$0xff] %vm762, %v757
  %764 = vst.msk [vmem:[#allocation2 + $0x8] sm:$0xff] %vm762, %v759
  %v765 = vpack.c.bf16 %v527, %v524
  %v766 = vpack.c.bf16 %v535, %v532
  %769 = vrot.lane.b32.xlu0 %v765, 28
  %v770 = vpop.permute.xlu0 %769
  %771 = vrot.lane.b32.xlu0 %v766, 28
  %v772 = vpop.permute.xlu0 %771
  %vm775 = vcmask 261344
  %776 = vst.msk [vmem:[#allocation2] sm:$0xff] %vm775, %v770
  %777 = vst.msk [vmem:[#allocation2 + $0x8] sm:$0xff] %vm775, %v772
  %v778 = vpack.c.bf16 %v543, %v540
  %v779 = vpack.c.bf16 %v551, %v548
  %782 = vrot.lane.b32.xlu0 %v778, 32
  %v783 = vpop.permute.xlu0 %782
  %784 = vrot.lane.b32.xlu0 %v779, 32
  %v785 = vpop.permute.xlu0 %784
  %vm788 = vcmask 294144
  %789 = vst.msk [vmem:[#allocation2] sm:$0xff] %vm788, %v783
  %790 = vst.msk [vmem:[#allocation2 + $0x8] sm:$0xff] %vm788, %v785
  %v791 = vpack.c.bf16 %v559, %v556
  %v792 = vpack.c.bf16 %v567, %v564
  %795 = vrot.lane.b32.xlu0 %v791, 36
  %v796 = vpop.permute.xlu0 %795
  %797 = vrot.lane.b32.xlu0 %v792, 36
  %v798 = vpop.permute.xlu0 %797
  %vm801 = vcmask 326944
  %802 = vst.msk [vmem:[#allocation2] sm:$0xff] %vm801, %v796
  %803 = vst.msk [vmem:[#allocation2 + $0x8] sm:$0xff] %vm801, %v798
  %v804 = vpack.c.bf16 %v575, %v572
  %v805 = vpack.c.bf16 %v583, %v580
  %808 = vrot.lane.b32.xlu0 %v804, 40
  %v809 = vpop.permute.xlu0 %808
  %810 = vrot.lane.b32.xlu0 %v805, 40
  %v811 = vpop.permute.xlu0 %810
  %vm814 = vcmask 359744
  %815 = vst.msk [vmem:[#allocation2] sm:$0xff] %vm814, %v809
  %816 = vst.msk [vmem:[#allocation2 + $0x8] sm:$0xff] %vm814, %v811
  %v817 = vpack.c.bf16 %v591, %v588
  %v818 = vpack.c.bf16 %v599, %v596
  %821 = vrot.lane.b32.xlu0 %v817, 44
  %v822 = vpop.permute.xlu0 %821
  %823 = vrot.lane.b32.xlu0 %v818, 44
  %v824 = vpop.permute.xlu0 %823
  %vm827 = vcmask 392544
  %828 = vst.msk [vmem:[#allocation2] sm:$0xff] %vm827, %v822
  %829 = vst.msk [vmem:[#allocation2 + $0x8] sm:$0xff] %vm827, %v824
  %v830 = vpack.c.bf16 %v607, %v604
  %v831 = vpack.c.bf16 %v615, %v612
  %834 = vrot.lane.b32.xlu0 %v830, 48
  %v835 = vpop.permute.xlu0 %834
  %836 = vrot.lane.b32.xlu0 %v831, 48
  %v837 = vpop.permute.xlu0 %836
  %vm840 = vcmask 425344
  %841 = vst.msk [vmem:[#allocation2] sm:$0xff] %vm840, %v835
  %842 = vst.msk [vmem:[#allocation2 + $0x8] sm:$0xff] %vm840, %v837
  %v843 = vpack.c.bf16 %v623, %v620
  %v844 = vpack.c.bf16 %v631, %v628
  %847 = vrot.lane.b32.xlu0 %v843, 52
  %v848 = vpop.permute.xlu0 %847
  %849 = vrot.lane.b32.xlu0 %v844, 52
  %v850 = vpop.permute.xlu0 %849
  %vm853 = vcmask 458144
  %854 = vst.msk [vmem:[#allocation2] sm:$0xff] %vm853, %v848
  %855 = vst.msk [vmem:[#allocation2 + $0x8] sm:$0xff] %vm853, %v850
  %v856 = vpack.c.bf16 %v639, %v636
  %v857 = vpack.c.bf16 %v647, %v644
  %860 = vrot.lane.b32.xlu0 %v856, 56
  %v861 = vpop.permute.xlu0 %860
  %862 = vrot.lane.b32.xlu0 %v857, 56
  %v863 = vpop.permute.xlu0 %862
  %vm866 = vcmask 490944
  %867 = vst.msk [vmem:[#allocation2] sm:$0xff] %vm866, %v861
  %868 = vst.msk [vmem:[#allocation2 + $0x8] sm:$0xff] %vm866, %v863
  %v869 = vpack.c.bf16 %v655, %v652
  %v870 = vpack.c.bf16 %v663, %v660
  %873 = vrot.lane.b32.xlu0 %v869, 60
  %v874 = vpop.permute.xlu0 %873
  %875 = vrot.lane.b32.xlu0 %v870, 60
  %v876 = vpop.permute.xlu0 %875
  %vm879 = vcmask 523744
  %880 = vst.msk [vmem:[#allocation2] sm:$0xff] %vm879, %v874
  %881 = vst.msk [vmem:[#allocation2 + $0x8] sm:$0xff] %vm879, %v876
  %v882 = vpack.c.bf16 %v671, %v668
  %v883 = vpack.c.bf16 %v679, %v676
  %886 = vrot.lane.b32.xlu0 %v882, 64
  %v887 = vpop.permute.xlu0 %886
  %888 = vrot.lane.b32.xlu0 %v883, 64
  %v889 = vpop.permute.xlu0 %888
  %vm892 = vcmask 556544
  %893 = vst.msk [vmem:[#allocation2] sm:$0xff] %vm892, %v887
  %894 = vst.msk [vmem:[#allocation2 + $0x8] sm:$0xff] %vm892, %v889
  %v895 = vld [vmem:[#allocation2] sm:$0xff]
  %v896 = vld [vmem:[#allocation2 + $0x8] sm:$0xff]
  %v897 = vld [vmem:[%s2] sm:$0xff]
  %v898 = vld [vmem:[%s2 + $0x8] sm:$0xff]
  %v899 = vld [vmem:[%s2 + $0x10] sm:$0xff]
  %v900 = vld [vmem:[%s2 + $0x18] sm:$0xff]
  %v901 = vld [vmem:[%s2 + $0x20] sm:$0xff]
  %v902 = vld [vmem:[%s2 + $0x28] sm:$0xff]
  %v903 = vld [vmem:[%s2 + $0x30] sm:$0xff]
  %v904 = vld [vmem:[%s2 + $0x38] sm:$0xff]
  %v905 = vld [vmem:[%s2 + $0x40] sm:$0xf]
  %v906 = vpack.c.bf16 %v898, %v897
  %v907 = vpack.c.bf16 %v900, %v899
  %v908 = vpack.c.bf16 %v902, %v901
  %v909 = vpack.c.bf16 %v904, %v903
  %v910 = vpack.c.bf16 %v905, %v905
  %v911 = vld [vmem:[%s3] sm:$0x1]
  %v913 = vlaneseq
  %v914 = vshrl.u32 %v913, 7
  %v915 = vsub.s32 0, %v914
  %v916 = vrot.slane %v911, %v915
  %vm918 = vcmask 556032
  %v920 = vsel %vm918, %v895, 0
  %v923 = vsel %vm918, %v896, 0
  %vm925 = vcmask 1041408
  %v927 = vsel %vm925, %v910, 0
  %929 = vmatprep.subr.bf16.mxu0 0
  %930 = vmatpush1.bf16.msra.mxu0 %v906
  %931 = vmatprep.subr.bf16.mxu0 0
  %932 = vmatpush1.bf16.msra.mxu0 %v907
  %933 = vmatprep.subr.bf16.mxu0 0
  %934 = vmatpush1.bf16.msra.mxu0 %v908
  %935 = vmatprep.subr.bf16.mxu0 0
  %936 = vmatpush1.bf16.msra.mxu0 %v909
  %937 = vmatprep.subr.bf16.mxu0 0
  %938 = vmatpush1.bf16.msra.mxu0 %v927
  %939 = vmatprep.subr.bf16.mxu0 0
  %940 = vmatpush1.bf16.msra.mxu0 0
  %941 = vmatprep.subr.bf16.mxu0 0
  %942 = vmatpush1.bf16.msra.mxu0 0
  %943 = vmatprep.subr.bf16.mxu0 0
  %944 = vmatpush1.bf16.msra.mxu0 0
  %945 = vmatprep.subr.bf16.mxu0 0
  %946 = vmatpush1.bf16.msra.mxu0 0
  %947 = vmatprep.subr.bf16.mxu0 0
  %948 = vmatpush1.bf16.msra.mxu0 0
  %949 = vmatprep.subr.bf16.mxu0 0
  %950 = vmatpush1.bf16.msra.mxu0 0
  %951 = vmatprep.subr.bf16.mxu0 0
  %952 = vmatpush1.bf16.msra.mxu0 0
  %953 = vmatprep.subr.bf16.mxu0 0
  %954 = vmatpush1.bf16.msra.mxu0 0
  %955 = vmatprep.subr.bf16.mxu0 0
  %956 = vmatpush1.bf16.msra.mxu0 0
  %957 = vmatprep.subr.bf16.mxu0 0
  %958 = vmatpush1.bf16.msra.mxu0 0
  %959 = vmatprep.subr.bf16.mxu0 0
  %960 = vmatpush1.bf16.msra.mxu0 0
  %961 = vmatprep.mubr.bf16.mxu0 0
  %962 = vmatmul.mubr.bf16.gmra.mrb[0].mxu0 %v920
  %v963 = vpop.f32.mrb[0].mxu0
  %v964 = vadd.f32 %v916, %v963
  %v965 = vpop.f32.mrb[0].mxu0
  %v966 = vpop.f32.mrb[0].mxu0
  %v967 = vadd.f32 %v916, %v966
  %v968 = vpop.f32.mrb[0].mxu0
  %969 = vmatprep.mubr.bf16.mxu0 0
  %970 = vmatmul.mubr.bf16.gmra.mrb[0].mxu0 %v923
  %v971 = vpop.f32.mrb[0].mxu0
  %v972 = vadd.f32 %v916, %v971
  %v973 = vpop.f32.mrb[0].mxu0
  %v974 = vpop.f32.mrb[0].mxu0
  %v975 = vadd.f32 %v916, %v974
  %v976 = vpop.f32.mrb[0].mxu0
  %977 = vdwg.mxu0
  %vm978 = vcmask 130048
  %v979 = vsel %vm978, %v964, 0.0
  %v980 = vsel %vm978, %v967, 0.0
  %v981 = vadd.f32 %v979, %v980
  %v982 = vsel %vm978, %v972, 0.0
  %v983 = vadd.f32 %v981, %v982
  %v984 = vsel %vm978, %v975, 0.0
  %v985 = vadd.f32 %v983, %v984
  %v986 = vrot.slane %v985, 4
  %v987 = vadd.f32 %v985, %v986
  %v988 = vrot.slane %v987, 2
  %v989 = vadd.f32 %v987, %v988
  %v990 = vrot.slane %v989, 1
  %v991 = vadd.f32 %v989, %v990
  %v992 = vrcp.pop 32.0
  %v993 = vmul.f32 %v991, %v992
  %v994 = vsub.f32 %v964, %v993
  %v995 = vsub.f32 %v967, %v993
  %v996 = vsub.f32 %v972, %v993
  %v997 = vsub.f32 %v975, %v993
  %v998 = vmul.f32 %v994, %v994
  %v999 = vmul.f32 %v995, %v995
  %v1000 = vmul.f32 %v996, %v996
  %v1001 = vmul.f32 %v997, %v997
  %v1002 = vsel %vm978, %v998, 0.0
  %v1003 = vsel %vm978, %v999, 0.0
  %v1004 = vadd.f32 %v1002, %v1003
  %v1005 = vsel %vm978, %v1000, 0.0
  %v1006 = vadd.f32 %v1004, %v1005
  %v1007 = vsel %vm978, %v1001, 0.0
  %v1008 = vadd.f32 %v1006, %v1007
  %v1009 = vrot.slane %v1008, 4
  %v1010 = vadd.f32 %v1008, %v1009
  %v1011 = vrot.slane %v1010, 2
  %v1012 = vadd.f32 %v1010, %v1011
  %v1013 = vrot.slane %v1012, 1
  %v1014 = vadd.f32 %v1012, %v1013
  %v1015 = vmul.f32 %v1014, %v992
  %v1016 = vadd.f32 %v1015, 1e-05
  %v1017 = vrsqrt.pop %v1016
  %v1018 = vmul.f32 %v994, %v1017
  %v1019 = vmul.f32 %v995, %v1017
  %v1020 = vmul.f32 %v996, %v1017
  %v1021 = vmul.f32 %v997, %v1017
  %v1022 = vmax.f32 %v1018, 0.0
  %v1023 = vmax.f32 %v1019, 0.0
  %v1024 = vmax.f32 %v1020, 0.0
  %v1025 = vmax.f32 %v1021, 0.0
  %v1026 = vpack.c.bf16 %v1023, %v1022
  %v1027 = vpack.c.bf16 %v1025, %v1024
  %1028 = vmatprep.subr.bf16.mxu0 0
  %1029 = vmatpush1.bf16.msra.mxu0 %v1026
  %1030 = vmatprep.subr.bf16.mxu0 0
  %1031 = vmatpush1.bf16.msra.mxu0 %v1027
  %1032 = vmatprep.subr.bf16.mxu0 0
  %1033 = vmatpush1.bf16.msra.mxu0 0
  %1034 = vmatprep.subr.bf16.mxu0 0
  %1035 = vmatpush1.bf16.msra.mxu0 0
  %1036 = vmatprep.subr.bf16.mxu0 0
  %1037 = vmatpush1.bf16.msra.mxu0 0
  %1038 = vmatprep.subr.bf16.mxu0 0
  %1039 = vmatpush1.bf16.msra.mxu0 0
  %1040 = vmatprep.subr.bf16.mxu0 0
  %1041 = vmatpush1.bf16.msra.mxu0 0
  %1042 = vmatprep.subr.bf16.mxu0 0
  %1043 = vmatpush1.bf16.msra.mxu0 0
  %1044 = vmatprep.subr.bf16.mxu0 0
  %1045 = vmatpush1.bf16.msra.mxu0 0
  %1046 = vmatprep.subr.bf16.mxu0 0
  %1047 = vmatpush1.bf16.msra.mxu0 0
  %1048 = vmatprep.subr.bf16.mxu0 0
  %1049 = vmatpush1.bf16.msra.mxu0 0
  %1050 = vmatprep.subr.bf16.mxu0 0
  %1051 = vmatpush1.bf16.msra.mxu0 0
  %1052 = vmatprep.subr.bf16.mxu0 0
  %1053 = vmatpush1.bf16.msra.mxu0 0
  %1054 = vmatprep.subr.bf16.mxu0 0
  %1055 = vmatpush1.bf16.msra.mxu0 0
  %1056 = vmatprep.subr.bf16.mxu0 0
  %1057 = vmatpush1.bf16.msra.mxu0 0
  %1058 = vmatprep.subr.bf16.mxu0 0
  %1059 = vmatpush1.bf16.msra.mxu0 0
  %1060 = vmatprep.mubr.bf16.mxu0 0
  %1061 = vmatmul.mubr.bf16.gmra.mrb[0].mxu0 %v276
  %v1062 = vpop.f32.mrb[0].mxu0
  %v1063 = vadd.f32 0.0, %v1062
  %v1064 = vpop.f32.mrb[0].mxu0
  %v1065 = vpop.f32.mrb[0].mxu0
  %v1066 = vadd.f32 0.0, %v1065
  %v1067 = vpop.f32.mrb[0].mxu0
  %1068 = vmatprep.mubr.bf16.mxu0 0
  %1069 = vmatmul.mubr.bf16.gmra.mrb[0].mxu0 %v279
  %v1070 = vpop.f32.mrb[0].mxu0
  %v1071 = vadd.f32 0.0, %v1070
  %v1072 = vpop.f32.mrb[0].mxu0
  %v1073 = vpop.f32.mrb[0].mxu0
  %v1074 = vadd.f32 0.0, %v1073
  %v1075 = vpop.f32.mrb[0].mxu0
  %1076 = vmatprep.mubr.bf16.mxu0 0
  %1077 = vmatmul.mubr.bf16.gmra.mrb[0].mxu0 %v282
  %v1078 = vpop.f32.mrb[0].mxu0
  %v1079 = vadd.f32 0.0, %v1078
  %v1080 = vpop.f32.mrb[0].mxu0
  %v1081 = vpop.f32.mrb[0].mxu0
  %v1082 = vadd.f32 0.0, %v1081
  %v1083 = vpop.f32.mrb[0].mxu0
  %1084 = vmatprep.mubr.bf16.mxu0 0
  %1085 = vmatmul.mubr.bf16.gmra.mrb[0].mxu0 %v285
  %v1086 = vpop.f32.mrb[0].mxu0
  %v1087 = vadd.f32 0.0, %v1086
  %v1088 = vpop.f32.mrb[0].mxu0
  %v1089 = vpop.f32.mrb[0].mxu0
  %v1090 = vadd.f32 0.0, %v1089
  %v1091 = vpop.f32.mrb[0].mxu0
  %1092 = vmatprep.mubr.bf16.mxu0 0
  %1093 = vmatmul.mubr.bf16.gmra.mrb[0].mxu0 %v288
  %v1094 = vpop.f32.mrb[0].mxu0
  %v1095 = vadd.f32 0.0, %v1094
  %v1096 = vpop.f32.mrb[0].mxu0
  %v1097 = vpop.f32.mrb[0].mxu0
  %v1098 = vadd.f32 0.0, %v1097
  %v1099 = vpop.f32.mrb[0].mxu0
  %1100 = vmatprep.mubr.bf16.mxu0 0
  %1101 = vmatmul.mubr.bf16.gmra.mrb[0].mxu0 %v291
  %v1102 = vpop.f32.mrb[0].mxu0
  %v1103 = vadd.f32 0.0, %v1102
  %v1104 = vpop.f32.mrb[0].mxu0
  %v1105 = vpop.f32.mrb[0].mxu0
  %v1106 = vadd.f32 0.0, %v1105
  %v1107 = vpop.f32.mrb[0].mxu0
  %1108 = vmatprep.mubr.bf16.mxu0 0
  %1109 = vmatmul.mubr.bf16.gmra.mrb[0].mxu0 %v294
  %v1110 = vpop.f32.mrb[0].mxu0
  %v1111 = vadd.f32 0.0, %v1110
  %v1112 = vpop.f32.mrb[0].mxu0
  %v1113 = vpop.f32.mrb[0].mxu0
  %v1114 = vadd.f32 0.0, %v1113
  %v1115 = vpop.f32.mrb[0].mxu0
  %1116 = vmatprep.mubr.bf16.mxu0 0
  %1117 = vmatmul.mubr.bf16.gmra.mrb[0].mxu0 %v297
  %v1118 = vpop.f32.mrb[0].mxu0
  %v1119 = vadd.f32 0.0, %v1118
  %v1120 = vpop.f32.mrb[0].mxu0
  %v1121 = vpop.f32.mrb[0].mxu0
  %v1122 = vadd.f32 0.0, %v1121
  %v1123 = vpop.f32.mrb[0].mxu0
  %1124 = vmatprep.mubr.bf16.mxu0 0
  %1125 = vmatmul.mubr.bf16.gmra.mrb[0].mxu0 %v300
  %v1126 = vpop.f32.mrb[0].mxu0
  %v1127 = vadd.f32 0.0, %v1126
  %v1128 = vpop.f32.mrb[0].mxu0
  %v1129 = vpop.f32.mrb[0].mxu0
  %v1130 = vadd.f32 0.0, %v1129
  %v1131 = vpop.f32.mrb[0].mxu0
  %1132 = vmatprep.mubr.bf16.mxu0 0
  %1133 = vmatmul.mubr.bf16.gmra.mrb[0].mxu0 %v303
  %v1134 = vpop.f32.mrb[0].mxu0
  %v1135 = vadd.f32 0.0, %v1134
  %v1136 = vpop.f32.mrb[0].mxu0
  %v1137 = vpop.f32.mrb[0].mxu0
  %v1138 = vadd.f32 0.0, %v1137
  %v1139 = vpop.f32.mrb[0].mxu0
  %1140 = vmatprep.mubr.bf16.mxu0 0
  %1141 = vmatmul.mubr.bf16.gmra.mrb[0].mxu0 %v306
  %v1142 = vpop.f32.mrb[0].mxu0
  %v1143 = vadd.f32 0.0, %v1142
  %v1144 = vpop.f32.mrb[0].mxu0
  %v1145 = vpop.f32.mrb[0].mxu0
  %v1146 = vadd.f32 0.0, %v1145
  %v1147 = vpop.f32.mrb[0].mxu0
  %1148 = vmatprep.mubr.bf16.mxu0 0
  %1149 = vmatmul.mubr.bf16.gmra.mrb[0].mxu0 %v309
  %v1150 = vpop.f32.mrb[0].mxu0
  %v1151 = vadd.f32 0.0, %v1150
  %v1152 = vpop.f32.mrb[0].mxu0
  %v1153 = vpop.f32.mrb[0].mxu0
  %v1154 = vadd.f32 0.0, %v1153
  %v1155 = vpop.f32.mrb[0].mxu0
  %1156 = vmatprep.mubr.bf16.mxu0 0
  %1157 = vmatmul.mubr.bf16.gmra.mrb[0].mxu0 %v312
  %v1158 = vpop.f32.mrb[0].mxu0
  %v1159 = vadd.f32 0.0, %v1158
  %v1160 = vpop.f32.mrb[0].mxu0
  %v1161 = vpop.f32.mrb[0].mxu0
  %v1162 = vadd.f32 0.0, %v1161
  %v1163 = vpop.f32.mrb[0].mxu0
  %1164 = vmatprep.mubr.bf16.mxu0 0
  %1165 = vmatmul.mubr.bf16.gmra.mrb[0].mxu0 %v315
  %v1166 = vpop.f32.mrb[0].mxu0
  %v1167 = vadd.f32 0.0, %v1166
  %v1168 = vpop.f32.mrb[0].mxu0
  %v1169 = vpop.f32.mrb[0].mxu0
  %v1170 = vadd.f32 0.0, %v1169
  %v1171 = vpop.f32.mrb[0].mxu0
  %1172 = vmatprep.mubr.bf16.mxu0 0
  %1173 = vmatmul.mubr.bf16.gmra.mrb[0].mxu0 %v318
  %v1174 = vpop.f32.mrb[0].mxu0
  %v1175 = vadd.f32 0.0, %v1174
  %v1176 = vpop.f32.mrb[0].mxu0
  %v1177 = vpop.f32.mrb[0].mxu0
  %v1178 = vadd.f32 0.0, %v1177
  %v1179 = vpop.f32.mrb[0].mxu0
  %1180 = vmatprep.mubr.bf16.mxu0 0
  %1181 = vmatmul.mubr.bf16.gmra.mrb[0].mxu0 %v321
  %v1182 = vpop.f32.mrb[0].mxu0
  %v1183 = vadd.f32 0.0, %v1182
  %v1184 = vpop.f32.mrb[0].mxu0
  %v1185 = vpop.f32.mrb[0].mxu0
  %v1186 = vadd.f32 0.0, %v1185
  %v1187 = vpop.f32.mrb[0].mxu0
  %1188 = vmatprep.mubr.bf16.mxu0 0
  %1189 = vmatmul.mubr.bf16.gmra.mrb[0].mxu0 %v324
  %v1190 = vpop.f32.mrb[0].mxu0
  %v1191 = vadd.f32 0.0, %v1190
  %v1192 = vpop.f32.mrb[0].mxu0
  %v1193 = vpop.f32.mrb[0].mxu0
  %v1194 = vadd.f32 0.0, %v1193
  %v1195 = vpop.f32.mrb[0].mxu0
  %1196 = vmatprep.mubr.bf16.mxu0 0
  %1197 = vmatmul.mubr.bf16.gmra.mrb[0].mxu0 %v327
  %v1198 = vpop.f32.mrb[0].mxu0
  %v1199 = vadd.f32 0.0, %v1198
  %v1200 = vpop.f32.mrb[0].mxu0
  %v1201 = vpop.f32.mrb[0].mxu0
  %v1202 = vadd.f32 0.0, %v1201
  %v1203 = vpop.f32.mrb[0].mxu0
  %1204 = vmatprep.mubr.bf16.mxu0 0
  %1205 = vmatmul.mubr.bf16.gmra.mrb[0].mxu0 %v330
  %v1206 = vpop.f32.mrb[0].mxu0
  %v1207 = vadd.f32 0.0, %v1206
  %v1208 = vpop.f32.mrb[0].mxu0
  %v1209 = vpop.f32.mrb[0].mxu0
  %v1210 = vadd.f32 0.0, %v1209
  %v1211 = vpop.f32.mrb[0].mxu0
  %1212 = vmatprep.mubr.bf16.mxu0 0
  %1213 = vmatmul.mubr.bf16.gmra.mrb[0].mxu0 %v333
  %v1214 = vpop.f32.mrb[0].mxu0
  %v1215 = vadd.f32 0.0, %v1214
  %v1216 = vpop.f32.mrb[0].mxu0
  %v1217 = vpop.f32.mrb[0].mxu0
  %v1218 = vadd.f32 0.0, %v1217
  %v1219 = vpop.f32.mrb[0].mxu0
  %1220 = vmatprep.mubr.bf16.mxu0 0
  %1221 = vmatmul.mubr.bf16.gmra.mrb[0].mxu0 %v336
  %v1222 = vpop.f32.mrb[0].mxu0
  %v1223 = vadd.f32 0.0, %v1222
  %v1224 = vpop.f32.mrb[0].mxu0
  %v1225 = vpop.f32.mrb[0].mxu0
  %v1226 = vadd.f32 0.0, %v1225
  %v1227 = vpop.f32.mrb[0].mxu0
  %1228 = vmatprep.mubr.bf16.mxu0 0
  %1229 = vmatmul.mubr.bf16.gmra.mrb[0].mxu0 %v339
  %v1230 = vpop.f32.mrb[0].mxu0
  %v1231 = vadd.f32 0.0, %v1230
  %v1232 = vpop.f32.mrb[0].mxu0
  %v1233 = vpop.f32.mrb[0].mxu0
  %v1234 = vadd.f32 0.0, %v1233
  %v1235 = vpop.f32.mrb[0].mxu0
  %1236 = vmatprep.mubr.bf16.mxu0 0
  %1237 = vmatmul.mubr.bf16.gmra.mrb[0].mxu0 %v342
  %v1238 = vpop.f32.mrb[0].mxu0
  %v1239 = vadd.f32 0.0, %v1238
  %v1240 = vpop.f32.mrb[0].mxu0
  %v1241 = vpop.f32.mrb[0].mxu0
  %v1242 = vadd.f32 0.0, %v1241
  %v1243 = vpop.f32.mrb[0].mxu0
  %1244 = vmatprep.mubr.bf16.mxu0 0
  %1245 = vmatmul.mubr.bf16.gmra.mrb[0].mxu0 %v345
  %v1246 = vpop.f32.mrb[0].mxu0
  %v1247 = vadd.f32 0.0, %v1246
  %v1248 = vpop.f32.mrb[0].mxu0
  %v1249 = vpop.f32.mrb[0].mxu0
  %v1250 = vadd.f32 0.0, %v1249
  %v1251 = vpop.f32.mrb[0].mxu0
  %1252 = vmatprep.mubr.bf16.mxu0 0
  %1253 = vmatmul.mubr.bf16.gmra.mrb[0].mxu0 %v348
  %v1254 = vpop.f32.mrb[0].mxu0
  %v1255 = vadd.f32 0.0, %v1254
  %v1256 = vpop.f32.mrb[0].mxu0
  %v1257 = vpop.f32.mrb[0].mxu0
  %v1258 = vadd.f32 0.0, %v1257
  %v1259 = vpop.f32.mrb[0].mxu0
  %1260 = vmatprep.mubr.bf16.mxu0 0
  %1261 = vmatmul.mubr.bf16.gmra.mrb[0].mxu0 %v351
  %v1262 = vpop.f32.mrb[0].mxu0
  %v1263 = vadd.f32 0.0, %v1262
  %v1264 = vpop.f32.mrb[0].mxu0
  %v1265 = vpop.f32.mrb[0].mxu0
  %v1266 = vadd.f32 0.0, %v1265
  %v1267 = vpop.f32.mrb[0].mxu0
  %1268 = vmatprep.mubr.bf16.mxu0 0
  %1269 = vmatmul.mubr.bf16.gmra.mrb[0].mxu0 %v354
  %v1270 = vpop.f32.mrb[0].mxu0
  %v1271 = vadd.f32 0.0, %v1270
  %v1272 = vpop.f32.mrb[0].mxu0
  %v1273 = vpop.f32.mrb[0].mxu0
  %v1274 = vadd.f32 0.0, %v1273
  %v1275 = vpop.f32.mrb[0].mxu0
  %1276 = vmatprep.mubr.bf16.mxu0 0
  %1277 = vmatmul.mubr.bf16.gmra.mrb[0].mxu0 %v357
  %v1278 = vpop.f32.mrb[0].mxu0
  %v1279 = vadd.f32 0.0, %v1278
  %v1280 = vpop.f32.mrb[0].mxu0
  %v1281 = vpop.f32.mrb[0].mxu0
  %v1282 = vadd.f32 0.0, %v1281
  %v1283 = vpop.f32.mrb[0].mxu0
  %1284 = vmatprep.mubr.bf16.mxu0 0
  %1285 = vmatmul.mubr.bf16.gmra.mrb[0].mxu0 %v360
  %v1286 = vpop.f32.mrb[0].mxu0
  %v1287 = vadd.f32 0.0, %v1286
  %v1288 = vpop.f32.mrb[0].mxu0
  %v1289 = vpop.f32.mrb[0].mxu0
  %v1290 = vadd.f32 0.0, %v1289
  %v1291 = vpop.f32.mrb[0].mxu0
  %1292 = vmatprep.mubr.bf16.mxu0 0
  %1293 = vmatmul.mubr.bf16.gmra.mrb[0].mxu0 %v363
  %v1294 = vpop.f32.mrb[0].mxu0
  %v1295 = vadd.f32 0.0, %v1294
  %v1296 = vpop.f32.mrb[0].mxu0
  %v1297 = vpop.f32.mrb[0].mxu0
  %v1298 = vadd.f32 0.0, %v1297
  %v1299 = vpop.f32.mrb[0].mxu0
  %1300 = vmatprep.mubr.bf16.mxu0 0
  %1301 = vmatmul.mubr.bf16.gmra.mrb[0].mxu0 %v366
  %v1302 = vpop.f32.mrb[0].mxu0
  %v1303 = vadd.f32 0.0, %v1302
  %v1304 = vpop.f32.mrb[0].mxu0
  %v1305 = vpop.f32.mrb[0].mxu0
  %v1306 = vadd.f32 0.0, %v1305
  %v1307 = vpop.f32.mrb[0].mxu0
  %1308 = vmatprep.mubr.bf16.mxu0 0
  %1309 = vmatmul.mubr.bf16.gmra.mrb[0].mxu0 %v369
  %v1310 = vpop.f32.mrb[0].mxu0
  %v1311 = vadd.f32 0.0, %v1310
  %v1312 = vpop.f32.mrb[0].mxu0
  %v1313 = vpop.f32.mrb[0].mxu0
  %v1314 = vadd.f32 0.0, %v1313
  %v1315 = vpop.f32.mrb[0].mxu0
  %1316 = vmatprep.mubr.bf16.mxu0 0
  %1317 = vmatmul.mubr.bf16.gmra.mrb[0].mxu0 %v372
  %v1318 = vpop.f32.mrb[0].mxu0
  %v1319 = vadd.f32 0.0, %v1318
  %v1320 = vpop.f32.mrb[0].mxu0
  %v1321 = vpop.f32.mrb[0].mxu0
  %v1322 = vadd.f32 0.0, %v1321
  %v1323 = vpop.f32.mrb[0].mxu0
  %1324 = vmatprep.mubr.bf16.mxu0 0
  %1325 = vmatmul.mubr.bf16.gmra.mrb[0].mxu0 %v375
  %v1326 = vpop.f32.mrb[0].mxu0
  %v1327 = vadd.f32 0.0, %v1326
  %v1328 = vpop.f32.mrb[0].mxu0
  %v1329 = vpop.f32.mrb[0].mxu0
  %v1330 = vadd.f32 0.0, %v1329
  %v1331 = vpop.f32.mrb[0].mxu0
  %1332 = vdwg.mxu0
  %v1333 = vpack.c.bf16 %v1066, %v1063
  %v1334 = vpack.c.bf16 %v1074, %v1071
  %1335 = vst.msk [vmem:[#allocation3] sm:$0xff] %vm978, %v1333
  %1336 = vst.msk [vmem:[#allocation3 + $0x18] sm:$0xff] %vm978, %v1334
  %v1337 = vpack.c.bf16 %v1082, %v1079
  %v1338 = vpack.c.bf16 %v1090, %v1087
  %1341 = vrot.lane.b32.xlu0 %v1337, 16
  %v1342 = vpop.permute.xlu0 %1341
  %1343 = vrot.lane.b32.xlu0 %v1338, 16
  %v1344 = vpop.permute.xlu0 %1343
  %vm1347 = vcmask 261248
  %1348 = vst.msk [vmem:[#allocation3] sm:$0xff] %vm1347, %v1342
  %1349 = vst.msk [vmem:[#allocation3 + $0x18] sm:$0xff] %vm1347, %v1344
  %v1350 = vpack.c.bf16 %v1098, %v1095
  %v1351 = vpack.c.bf16 %v1106, %v1103
  %1354 = vrot.lane.b32.xlu0 %v1350, 32
  %v1355 = vpop.permute.xlu0 %1354
  %1356 = vrot.lane.b32.xlu0 %v1351, 32
  %v1357 = vpop.permute.xlu0 %1356
  %vm1360 = vcmask 392448
  %1361 = vst.msk [vmem:[#allocation3] sm:$0xff] %vm1360, %v1355
  %1362 = vst.msk [vmem:[#allocation3 + $0x18] sm:$0xff] %vm1360, %v1357
  %v1363 = vpack.c.bf16 %v1114, %v1111
  %v1364 = vpack.c.bf16 %v1122, %v1119
  %1367 = vrot.lane.b32.xlu0 %v1363, 48
  %v1368 = vpop.permute.xlu0 %1367
  %1369 = vrot.lane.b32.xlu0 %v1364, 48
  %v1370 = vpop.permute.xlu0 %1369
  %vm1373 = vcmask 523648
  %1374 = vst.msk [vmem:[#allocation3] sm:$0xff] %vm1373, %v1368
  %1375 = vst.msk [vmem:[#allocation3 + $0x18] sm:$0xff] %vm1373, %v1370
  %v1376 = vpack.c.bf16 %v1130, %v1127
  %v1377 = vpack.c.bf16 %v1138, %v1135
  %1380 = vrot.lane.b32.xlu0 %v1376, 64
  %v1381 = vpop.permute.xlu0 %1380
  %1382 = vrot.lane.b32.xlu0 %v1377, 64
  %v1383 = vpop.permute.xlu0 %1382
  %vm1386 = vcmask 654848
  %1387 = vst.msk [vmem:[#allocation3] sm:$0xff] %vm1386, %v1381
  %1388 = vst.msk [vmem:[#allocation3 + $0x18] sm:$0xff] %vm1386, %v1383
  %v1389 = vpack.c.bf16 %v1146, %v1143
  %v1390 = vpack.c.bf16 %v1154, %v1151
  %1393 = vrot.lane.b32.xlu0 %v1389, 80
  %v1394 = vpop.permute.xlu0 %1393
  %1395 = vrot.lane.b32.xlu0 %v1390, 80
  %v1396 = vpop.permute.xlu0 %1395
  %vm1399 = vcmask 786048
  %1400 = vst.msk [vmem:[#allocation3] sm:$0xff] %vm1399, %v1394
  %1401 = vst.msk [vmem:[#allocation3 + $0x18] sm:$0xff] %vm1399, %v1396
  %v1402 = vpack.c.bf16 %v1162, %v1159
  %v1403 = vpack.c.bf16 %v1170, %v1167
  %1406 = vrot.lane.b32.xlu0 %v1402, 96
  %v1407 = vpop.permute.xlu0 %1406
  %1408 = vrot.lane.b32.xlu0 %v1403, 96
  %v1409 = vpop.permute.xlu0 %1408
  %vm1412 = vcmask 917248
  %1413 = vst.msk [vmem:[#allocation3] sm:$0xff] %vm1412, %v1407
  %1414 = vst.msk [vmem:[#allocation3 + $0x18] sm:$0xff] %vm1412, %v1409
  %v1415 = vpack.c.bf16 %v1178, %v1175
  %v1416 = vpack.c.bf16 %v1186, %v1183
  %1419 = vrot.lane.b32.xlu0 %v1415, 112
  %v1420 = vpop.permute.xlu0 %1419
  %1421 = vrot.lane.b32.xlu0 %v1416, 112
  %v1422 = vpop.permute.xlu0 %1421
  %vm1425 = vcmask 1048448
  %1426 = vst.msk [vmem:[#allocation3] sm:$0xff] %vm1425, %v1420
  %1427 = vst.msk [vmem:[#allocation3 + $0x18] sm:$0xff] %vm1425, %v1422
  %v1428 = vpack.c.bf16 %v1194, %v1191
  %v1429 = vpack.c.bf16 %v1202, %v1199
  %1430 = vst.msk [vmem:[#allocation3 + $0x8] sm:$0xff] %vm978, %v1428
  %1431 = vst.msk [vmem:[#allocation3 + $0x20] sm:$0xff] %vm978, %v1429
  %v1432 = vpack.c.bf16 %v1210, %v1207
  %v1433 = vpack.c.bf16 %v1218, %v1215
  %1436 = vrot.lane.b32.xlu0 %v1432, 16
  %v1437 = vpop.permute.xlu0 %1436
  %1438 = vrot.lane.b32.xlu0 %v1433, 16
  %v1439 = vpop.permute.xlu0 %1438
  %1442 = vst.msk [vmem:[#allocation3 + $0x8] sm:$0xff] %vm1347, %v1437
  %1443 = vst.msk [vmem:[#allocation3 + $0x20] sm:$0xff] %vm1347, %v1439
  %v1444 = vpack.c.bf16 %v1226, %v1223
  %v1445 = vpack.c.bf16 %v1234, %v1231
  %1448 = vrot.lane.b32.xlu0 %v1444, 32
  %v1449 = vpop.permute.xlu0 %1448
  %1450 = vrot.lane.b32.xlu0 %v1445, 32
  %v1451 = vpop.permute.xlu0 %1450
  %1454 = vst.msk [vmem:[#allocation3 + $0x8] sm:$0xff] %vm1360, %v1449
  %1455 = vst.msk [vmem:[#allocation3 + $0x20] sm:$0xff] %vm1360, %v1451
  %v1456 = vpack.c.bf16 %v1242, %v1239
  %v1457 = vpack.c.bf16 %v1250, %v1247
  %1460 = vrot.lane.b32.xlu0 %v1456, 48
  %v1461 = vpop.permute.xlu0 %1460
  %1462 = vrot.lane.b32.xlu0 %v1457, 48
  %v1463 = vpop.permute.xlu0 %1462
  %1466 = vst.msk [vmem:[#allocation3 + $0x8] sm:$0xff] %vm1373, %v1461
  %1467 = vst.msk [vmem:[#allocation3 + $0x20] sm:$0xff] %vm1373, %v1463
  %v1468 = vpack.c.bf16 %v1258, %v1255
  %v1469 = vpack.c.bf16 %v1266, %v1263
  %1472 = vrot.lane.b32.xlu0 %v1468, 64
  %v1473 = vpop.permute.xlu0 %1472
  %1474 = vrot.lane.b32.xlu0 %v1469, 64
  %v1475 = vpop.permute.xlu0 %1474
  %1478 = vst.msk [vmem:[#allocation3 + $0x8] sm:$0xff] %vm1386, %v1473
  %1479 = vst.msk [vmem:[#allocation3 + $0x20] sm:$0xff] %vm1386, %v1475
  %v1480 = vpack.c.bf16 %v1274, %v1271
  %v1481 = vpack.c.bf16 %v1282, %v1279
  %1484 = vrot.lane.b32.xlu0 %v1480, 80
  %v1485 = vpop.permute.xlu0 %1484
  %1486 = vrot.lane.b32.xlu0 %v1481, 80
  %v1487 = vpop.permute.xlu0 %1486
  %1490 = vst.msk [vmem:[#allocation3 + $0x8] sm:$0xff] %vm1399, %v1485
  %1491 = vst.msk [vmem:[#allocation3 + $0x20] sm:$0xff] %vm1399, %v1487
  %v1492 = vpack.c.bf16 %v1290, %v1287
  %v1493 = vpack.c.bf16 %v1298, %v1295
  %1496 = vrot.lane.b32.xlu0 %v1492, 96
  %v1497 = vpop.permute.xlu0 %1496
  %1498 = vrot.lane.b32.xlu0 %v1493, 96
  %v1499 = vpop.permute.xlu0 %1498
  %1502 = vst.msk [vmem:[#allocation3 + $0x8] sm:$0xff] %vm1412, %v1497
  %1503 = vst.msk [vmem:[#allocation3 + $0x20] sm:$0xff] %vm1412, %v1499
  %v1504 = vpack.c.bf16 %v1306, %v1303
  %v1505 = vpack.c.bf16 %v1314, %v1311
  %1508 = vrot.lane.b32.xlu0 %v1504, 112
  %v1509 = vpop.permute.xlu0 %1508
  %1510 = vrot.lane.b32.xlu0 %v1505, 112
  %v1511 = vpop.permute.xlu0 %1510
  %1514 = vst.msk [vmem:[#allocation3 + $0x8] sm:$0xff] %vm1425, %v1509
  %1515 = vst.msk [vmem:[#allocation3 + $0x20] sm:$0xff] %vm1425, %v1511
  %v1516 = vpack.c.bf16 %v1322, %v1319
  %v1517 = vpack.c.bf16 %v1330, %v1327
  %1518 = vst.msk [vmem:[#allocation3 + $0x10] sm:$0xff] %vm978, %v1516
  %1519 = vst.msk [vmem:[#allocation3 + $0x28] sm:$0xff] %vm978, %v1517
  %v1520 = vld [vmem:[#allocation3] sm:$0xff]
  %v1521 = vld [vmem:[#allocation3 + $0x8] sm:$0xff]
  %v1522 = vld [vmem:[#allocation3 + $0x10] sm:$0xff]
  %v1523 = vld [vmem:[#allocation3 + $0x18] sm:$0xff]
  %v1524 = vld [vmem:[#allocation3 + $0x20] sm:$0xff]
  %v1525 = vld [vmem:[#allocation3 + $0x28] sm:$0xff]
  %v1526 = vld [vmem:[%s4] sm:$0xff]
  %v1527 = vld [vmem:[%s4 + $0x8] sm:$0xff]
  %v1528 = vld [vmem:[%s4 + $0x10] sm:$0xff]
  %v1529 = vld [vmem:[%s4 + $0x18] sm:$0xff]
  %v1530 = vld [vmem:[%s4 + $0x20] sm:$0xff]
  %v1531 = vld [vmem:[%s4 + $0x28] sm:$0xff]
  %v1532 = vld [vmem:[%s4 + $0x30] sm:$0xff]
  %v1533 = vld [vmem:[%s4 + $0x38] sm:$0xff]
  %v1534 = vld [vmem:[%s4 + $0x40] sm:$0xff]
  %v1535 = vld [vmem:[%s4 + $0x48] sm:$0xff]
  %v1536 = vld [vmem:[%s4 + $0x50] sm:$0xff]
  %v1537 = vld [vmem:[%s4 + $0x58] sm:$0xff]
  %v1538 = vld [vmem:[%s4 + $0x60] sm:$0xff]
  %v1539 = vld [vmem:[%s4 + $0x68] sm:$0xff]
  %v1540 = vld [vmem:[%s4 + $0x70] sm:$0xff]
  %v1541 = vld [vmem:[%s4 + $0x78] sm:$0xff]
  %v1542 = vld [vmem:[%s4 + $0x80] sm:$0xff]
  %v1543 = vld [vmem:[%s4 + $0x88] sm:$0xff]
  %v1544 = vld [vmem:[%s4 + $0x90] sm:$0xff]
  %v1545 = vld [vmem:[%s4 + $0x98] sm:$0xff]
  %v1546 = vld [vmem:[%s4 + $0xa0] sm:$0xff]
  %v1547 = vld [vmem:[%s4 + $0xa8] sm:$0xff]
  %v1548 = vld [vmem:[%s4 + $0xb0] sm:$0xff]
  %v1549 = vld [vmem:[%s4 + $0xb8] sm:$0xff]
  %v1550 = vld [vmem:[%s4 + $0xc0] sm:$0xff]
  %v1551 = vld [vmem:[%s4 + $0xc8] sm:$0xff]
  %v1552 = vld [vmem:[%s4 + $0xd0] sm:$0xff]
  %v1553 = vld [vmem:[%s4 + $0xd8] sm:$0xff]
  %v1554 = vld [vmem:[%s4 + $0xe0] sm:$0xff]
  %v1555 = vld [vmem:[%s4 + $0xe8] sm:$0xff]
  %v1556 = vld [vmem:[%s4 + $0xf0] sm:$0xff]
  %v1557 = vld [vmem:[%s4 + $0xf8] sm:$0xff]
  %v1558 = vld [vmem:[%s4 + $0x100] sm:$0xff]
  %v1559 = vld [vmem:[%s4 + $0x108] sm:$0xff]
  %v1560 = vpack.c.bf16 %v1527, %v1526
  %v1561 = vpack.c.bf16 %v1529, %v1528
  %v1562 = vpack.c.bf16 %v1531, %v1530
  %v1563 = vpack.c.bf16 %v1533, %v1532
  %v1564 = vpack.c.bf16 %v1535, %v1534
  %v1565 = vpack.c.bf16 %v1537, %v1536
  %v1566 = vpack.c.bf16 %v1539, %v1538
  %v1567 = vpack.c.bf16 %v1541, %v1540
  %v1568 = vpack.c.bf16 %v1543, %v1542
  %v1569 = vpack.c.bf16 %v1545, %v1544
  %v1570 = vpack.c.bf16 %v1547, %v1546
  %v1571 = vpack.c.bf16 %v1549, %v1548
  %v1572 = vpack.c.bf16 %v1551, %v1550
  %v1573 = vpack.c.bf16 %v1553, %v1552
  %v1574 = vpack.c.bf16 %v1555, %v1554
  %v1575 = vpack.c.bf16 %v1557, %v1556
  %v1576 = vpack.c.bf16 %v1559, %v1558
  %v1577 = vld [vmem:[%s5] sm:$0x1]
  %v1579 = vlaneseq
  %v1580 = vshrl.u32 %v1579, 7
  %v1581 = vsub.s32 0, %v1580
  %v1582 = vrot.slane %v1577, %v1581
  %v1585 = vsel %vm978, %v1522, 0
  %v1588 = vsel %vm978, %v1525, 0
  %1590 = vmatprep.subr.bf16.mxu0 0
  %1591 = vmatpush1.bf16.msra.mxu0 %v1560
  %1592 = vmatprep.subr.bf16.mxu0 0
  %1593 = vmatpush1.bf16.msra.mxu0 %v1561
  %1594 = vmatprep.subr.bf16.mxu0 0
  %1595 = vmatpush1.bf16.msra.mxu0 %v1562
  %1596 = vmatprep.subr.bf16.mxu0 0
  %1597 = vmatpush1.bf16.msra.mxu0 %v1563
  %1598 = vmatprep.subr.bf16.mxu0 0
  %1599 = vmatpush1.bf16.msra.mxu0 %v1564
  %1600 = vmatprep.subr.bf16.mxu0 0
  %1601 = vmatpush1.bf16.msra.mxu0 %v1565
  %1602 = vmatprep.subr.bf16.mxu0 0
  %1603 = vmatpush1.bf16.msra.mxu0 %v1566
  %1604 = vmatprep.subr.bf16.mxu0 0
  %1605 = vmatpush1.bf16.msra.mxu0 %v1567
  %1606 = vmatprep.subr.bf16.mxu0 0
  %1607 = vmatpush1.bf16.msra.mxu0 %v1568
  %1608 = vmatprep.subr.bf16.mxu0 0
  %1609 = vmatpush1.bf16.msra.mxu0 %v1569
  %1610 = vmatprep.subr.bf16.mxu0 0
  %1611 = vmatpush1.bf16.msra.mxu0 %v1570
  %1612 = vmatprep.subr.bf16.mxu0 0
  %1613 = vmatpush1.bf16.msra.mxu0 %v1571
  %1614 = vmatprep.subr.bf16.mxu0 0
  %1615 = vmatpush1.bf16.msra.mxu0 %v1572
  %1616 = vmatprep.subr.bf16.mxu0 0
  %1617 = vmatpush1.bf16.msra.mxu0 %v1573
  %1618 = vmatprep.subr.bf16.mxu0 0
  %1619 = vmatpush1.bf16.msra.mxu0 %v1574
  %1620 = vmatprep.subr.bf16.mxu0 0
  %1621 = vmatpush1.bf16.msra.mxu0 %v1575
  %1622 = vmatprep.mubr.bf16.mxu0 %v1521
  %1623 = vmatmul.mubr.bf16.gmra.mrb[0].mxu0 %v1520
  %v1624 = vpop.f32.mrb[0].mxu0
  %v1625 = vadd.f32 %v1582, %v1624
  %v1626 = vpop.f32.mrb[0].mxu0
  %v1627 = vpop.f32.mrb[0].mxu0
  %v1628 = vadd.f32 %v1582, %v1627
  %v1629 = vpop.f32.mrb[0].mxu0
  %1630 = vmatprep.mubr.bf16.mxu0 %v1524
  %1631 = vmatmul.mubr.bf16.gmra.mrb[0].mxu0 %v1523
  %v1632 = vpop.f32.mrb[0].mxu0
  %v1633 = vadd.f32 %v1582, %v1632
  %v1634 = vpop.f32.mrb[0].mxu0
  %v1635 = vpop.f32.mrb[0].mxu0
  %v1636 = vadd.f32 %v1582, %v1635
  %v1637 = vpop.f32.mrb[0].mxu0
  %1638 = vdwg.mxu0
  %1639 = vmatprep.subr.bf16.mxu0 0
  %1640 = vmatpush1.bf16.msra.mxu0 %v1576
  %1641 = vmatprep.subr.bf16.mxu0 0
  %1642 = vmatpush1.bf16.msra.mxu0 0
  %1643 = vmatprep.subr.bf16.mxu0 0
  %1644 = vmatpush1.bf16.msra.mxu0 0
  %1645 = vmatprep.subr.bf16.mxu0 0
  %1646 = vmatpush1.bf16.msra.mxu0 0
  %1647 = vmatprep.subr.bf16.mxu0 0
  %1648 = vmatpush1.bf16.msra.mxu0 0
  %1649 = vmatprep.subr.bf16.mxu0 0
  %1650 = vmatpush1.bf16.msra.mxu0 0
  %1651 = vmatprep.subr.bf16.mxu0 0
  %1652 = vmatpush1.bf16.msra.mxu0 0
  %1653 = vmatprep.subr.bf16.mxu0 0
  %1654 = vmatpush1.bf16.msra.mxu0 0
  %1655 = vmatprep.subr.bf16.mxu0 0
  %1656 = vmatpush1.bf16.msra.mxu0 0
  %1657 = vmatprep.subr.bf16.mxu0 0
  %1658 = vmatpush1.bf16.msra.mxu0 0
  %1659 = vmatprep.subr.bf16.mxu0 0
  %1660 = vmatpush1.bf16.msra.mxu0 0
  %1661 = vmatprep.subr.bf16.mxu0 0
  %1662 = vmatpush1.bf16.msra.mxu0 0
  %1663 = vmatprep.subr.bf16.mxu0 0
  %1664 = vmatpush1.bf16.msra.mxu0 0
  %1665 = vmatprep.subr.bf16.mxu0 0
  %1666 = vmatpush1.bf16.msra.mxu0 0
  %1667 = vmatprep.subr.bf16.mxu0 0
  %1668 = vmatpush1.bf16.msra.mxu0 0
  %1669 = vmatprep.subr.bf16.mxu0 0
  %1670 = vmatpush1.bf16.msra.mxu0 0
  %1671 = vmatprep.mubr.bf16.mxu0 0
  %1672 = vmatmul.mubr.bf16.gmra.mrb[0].mxu0 %v1585
  %v1673 = vpop.f32.mrb[0].mxu0
  %v1674 = vadd.f32 %v1625, %v1673
  %v1675 = vpop.f32.mrb[0].mxu0
  %v1676 = vpop.f32.mrb[0].mxu0
  %v1677 = vadd.f32 %v1628, %v1676
  %v1678 = vpop.f32.mrb[0].mxu0
  %1679 = vmatprep.mubr.bf16.mxu0 0
  %1680 = vmatmul.mubr.bf16.gmra.mrb[0].mxu0 %v1588
  %v1681 = vpop.f32.mrb[0].mxu0
  %v1682 = vadd.f32 %v1633, %v1681
  %v1683 = vpop.f32.mrb[0].mxu0
  %v1684 = vpop.f32.mrb[0].mxu0
  %v1685 = vadd.f32 %v1636, %v1684
  %v1686 = vpop.f32.mrb[0].mxu0
  %1687 = vdwg.mxu0
  %vm1688 = vcmask 64512
  %v1689 = vsel %vm1688, %v1674, 0.0
  %v1690 = vsel %vm1688, %v1677, 0.0
  %v1691 = vadd.f32 %v1689, %v1690
  %v1692 = vsel %vm1688, %v1682, 0.0
  %v1693 = vadd.f32 %v1691, %v1692
  %v1694 = vsel %vm1688, %v1685, 0.0
  %v1695 = vadd.f32 %v1693, %v1694
  %v1696 = vrot.slane %v1695, 4
  %v1697 = vadd.f32 %v1695, %v1696
  %v1698 = vrot.slane %v1697, 2
  %v1699 = vadd.f32 %v1697, %v1698
  %v1700 = vrot.slane %v1699, 1
  %v1701 = vadd.f32 %v1699, %v1700
  %v1702 = vmul.f32 %v1701, %v992
  %v1703 = vsub.f32 %v1674, %v1702
  %v1704 = vsub.f32 %v1677, %v1702
  %v1705 = vsub.f32 %v1682, %v1702
  %v1706 = vsub.f32 %v1685, %v1702
  %v1707 = vmul.f32 %v1703, %v1703
  %v1708 = vmul.f32 %v1704, %v1704
  %v1709 = vmul.f32 %v1705, %v1705
  %v1710 = vmul.f32 %v1706, %v1706
  %v1711 = vsel %vm1688, %v1707, 0.0
  %v1712 = vsel %vm1688, %v1708, 0.0
  %v1713 = vadd.f32 %v1711, %v1712
  %v1714 = vsel %vm1688, %v1709, 0.0
  %v1715 = vadd.f32 %v1713, %v1714
  %v1716 = vsel %vm1688, %v1710, 0.0
  %v1717 = vadd.f32 %v1715, %v1716
  %v1718 = vrot.slane %v1717, 4
  %v1719 = vadd.f32 %v1717, %v1718
  %v1720 = vrot.slane %v1719, 2
  %v1721 = vadd.f32 %v1719, %v1720
  %v1722 = vrot.slane %v1721, 1
  %v1723 = vadd.f32 %v1721, %v1722
  %v1724 = vmul.f32 %v1723, %v992
  %v1725 = vadd.f32 %v1724, 1e-05
  %v1726 = vrsqrt.pop %v1725
  %v1727 = vmul.f32 %v1703, %v1726
  %v1728 = vmul.f32 %v1704, %v1726
  %v1729 = vmul.f32 %v1705, %v1726
  %v1730 = vmul.f32 %v1706, %v1726
  %v1731 = vmax.f32 %v1727, 0.0
  %v1732 = vmax.f32 %v1728, 0.0
  %v1733 = vmax.f32 %v1729, 0.0
  %v1734 = vmax.f32 %v1730, 0.0
  %v1735 = vpack.c.bf16 %v1732, %v1731
  %v1736 = vpack.c.bf16 %v1734, %v1733
  %v1737 = vld [vmem:[%s6] sm:$0xff]
  %v1738 = vpack.c.bf16 %v1737, %v1737
  %v1739 = vld [vmem:[%s7] sm:$0x1]
  %v1741 = vlaneseq
  %v1742 = vshrl.u32 %v1741, 7
  %v1743 = vsub.s32 0, %v1742
  %v1744 = vrot.slane %v1739, %v1743
  %v1747 = vsel %vm1688, %v1735, 0
  %v1750 = vsel %vm1688, %v1736, 0
  %vm1752 = vcmask 1043456
  %v1754 = vsel %vm1752, %v1738, 0
  %1756 = vmatprep.subr.bf16.mxu0 0
  %1757 = vmatpush1.bf16.msra.mxu0 %v1754
  %1758 = vmatprep.subr.bf16.mxu0 0
  %1759 = vmatpush1.bf16.msra.mxu0 0
  %1760 = vmatprep.subr.bf16.mxu0 0
  %1761 = vmatpush1.bf16.msra.mxu0 0
  %1762 = vmatprep.subr.bf16.mxu0 0
  %1763 = vmatpush1.bf16.msra.mxu0 0
  %1764 = vmatprep.subr.bf16.mxu0 0
  %1765 = vmatpush1.bf16.msra.mxu0 0
  %1766 = vmatprep.subr.bf16.mxu0 0
  %1767 = vmatpush1.bf16.msra.mxu0 0
  %1768 = vmatprep.subr.bf16.mxu0 0
  %1769 = vmatpush1.bf16.msra.mxu0 0
  %1770 = vmatprep.subr.bf16.mxu0 0
  %1771 = vmatpush1.bf16.msra.mxu0 0
  %1772 = vmatprep.subr.bf16.mxu0 0
  %1773 = vmatpush1.bf16.msra.mxu0 0
  %1774 = vmatprep.subr.bf16.mxu0 0
  %1775 = vmatpush1.bf16.msra.mxu0 0
  %1776 = vmatprep.subr.bf16.mxu0 0
  %1777 = vmatpush1.bf16.msra.mxu0 0
  %1778 = vmatprep.subr.bf16.mxu0 0
  %1779 = vmatpush1.bf16.msra.mxu0 0
  %1780 = vmatprep.subr.bf16.mxu0 0
  %1781 = vmatpush1.bf16.msra.mxu0 0
  %1782 = vmatprep.subr.bf16.mxu0 0
  %1783 = vmatpush1.bf16.msra.mxu0 0
  %1784 = vmatprep.subr.bf16.mxu0 0
  %1785 = vmatpush1.bf16.msra.mxu0 0
  %1786 = vmatprep.subr.bf16.mxu0 0
  %1787 = vmatpush1.bf16.msra.mxu0 0
  %1788 = vmatprep.mubr.bf16.mxu0 0
  %1789 = vmatmul.mubr.bf16.gmra.mrb[0].mxu0 %v1747
  %v1790 = vpop.f32.mrb[0].mxu0
  %v1791 = vadd.f32 %v1744, %v1790
  %v1792 = vpop.f32.mrb[0].mxu0
  %v1793 = vpop.f32.mrb[0].mxu0
  %v1794 = vadd.f32 %v1744, %v1793
  %v1795 = vpop.f32.mrb[0].mxu0
  %1796 = vmatprep.mubr.bf16.mxu0 0
  %1797 = vmatmul.mubr.bf16.gmra.mrb[0].mxu0 %v1750
  %v1798 = vpop.f32.mrb[0].mxu0
  %v1799 = vadd.f32 %v1744, %v1798
  %v1800 = vpop.f32.mrb[0].mxu0
  %v1801 = vpop.f32.mrb[0].mxu0
  %v1802 = vadd.f32 %v1744, %v1801
  %v1803 = vpop.f32.mrb[0].mxu0
  %1804 = vdwg.mxu0
  %1805 = vst.msk [vmem:[%s8] sm:$0xff] %vm684, %v1791
  %1806 = vst.msk [vmem:[%s8 + $0x8] sm:$0xff] %vm684, %v1794
  %1807 = vst.msk [vmem:[%s8 + $0x10] sm:$0xff] %vm684, %v1799
  %1808 = vst.msk [vmem:[%s8 + $0x18] sm:$0xff] %vm684, %v1802
  // Predicated region
  $region34: #{tpu_custom_call.1} parent=0 // pred_check
    _
  $region35: #{tpu_custom_call.1} parent=0 // pred_check_branch
    %1810 = sbr.rel (0) target = $region37
  $region36: #{tpu_custom_call.1} parent=0 // pred_region
    _
  $region37: #{tpu_custom_call.1} parent=0 // pred_fallthru
    _
  // Predicated region
  $region38: #{tpu_custom_call.1} parent=0 // pred_check
    _
  $region39: #{tpu_custom_call.1} parent=0 // pred_check_branch
    %1812 = sbr.rel (0) target = $region41
  $region40: #{tpu_custom_call.1} parent=0 // pred_region
    _
  $region41: #{tpu_custom_call.1} parent=0 // pred_fallthru
    _

</llo_original>
